<compile_context>
chip_gen: v5e
topology: v5e:2x2
jax: 0.10.0
libtpu: 0.0.40
codegen_flags: <defaults>
</compile_context>

<pallas_src>
import functools

import jax
import jax.numpy as jnp
from jax.experimental import pallas as pl
from jax.experimental.pallas import tpu as pltpu


_SQRT_HALF = 0.7071067811865476


# ----------------------- generation-aware tiling knobs -----------------------

def _tpu_vmem_capacity():
    try:
        info = pltpu.get_tpu_info()
        cap = getattr(info, "vmem_capacity_bytes", None)
        if cap:
            return int(cap)
    except Exception:
        pass
    return 64 * 1024 * 1024  # conservative (v7x-sized) fallback


_VMEM_CAP = _tpu_vmem_capacity()
_BIG_VMEM = _VMEM_CAP >= 100 * 1024 * 1024          # v5e / v6e (128 MiB)
_VMEM_LIMIT = (96 if _BIG_VMEM else 40) * 1024 * 1024
_ROW_CAP = 512 if _BIG_VMEM else 256                # row-tile cap (8-aligned)
_COL_CAP = 1024 if _BIG_VMEM else 512               # column-tile cap (128-aligned)


def _row_tile(M):
    # full extent if it fits (always a legal block), else an 8-aligned cap;
    # ragged last block is handled by Pallas' masked loads/stores.
    return M if M <= _ROW_CAP else _ROW_CAP


def _col_tile(N):
    return N if N <= _COL_CAP else _COL_CAP


def _compiler_params(ngrid):
    return pltpu.CompilerParams(
        dimension_semantics=("parallel",) * ngrid,
        vmem_limit_bytes=_VMEM_LIMIT)


# ----------------------------- in-kernel helpers -----------------------------

def _erf(x):
    # Abramowitz & Stegun 7.1.26 polynomial (|err| < 1.5e-7). Uses only
    # exp / mul / add / select / approx-reciprocal (VPU + EUP).
    a1, a2, a3, a4, a5 = 0.254829592, -0.284496736, 1.421413741, -1.453152027, 1.061405429
    pp = 0.3275911
    sgn = jnp.where(x >= 0.0, 1.0, -1.0)
    ax = jnp.abs(x)
    t = pl.reciprocal(1.0 + pp * ax, approx=True)
    poly = ((((a5 * t + a4) * t + a3) * t + a2) * t + a1) * t
    return sgn * (1.0 - poly * jnp.exp(-ax * ax))


def _gelu_exact(x):
    # matches nn.GELU() (erf-based, not tanh approximation)
    return 0.5 * x * (1.0 + _erf(x * _SQRT_HALF))


def _apply_epilogue(y, bias_ref, act, res_ref):
    if bias_ref is not None:
        y = y + bias_ref[...].astype(jnp.float32)
    if act == "gelu":
        y = _gelu_exact(y)
    elif act == "relu":
        y = jnp.maximum(y, 0.0)
    if res_ref is not None:
        y = y + res_ref[...].astype(jnp.float32)
    return y


# ----------------------------- Pallas kernels -----------------------------

def _ln_mm_kernel(*refs, act, eps, has_bias):
    # fused LayerNorm (over K) -> matmul -> bias -> activation
    if has_bias:
        x_ref, g_ref, b_ref, w_ref, bias_ref, o_ref = refs
    else:
        x_ref, g_ref, b_ref, w_ref, o_ref = refs
        bias_ref = None
    x = x_ref[...].astype(jnp.float32)
    mu = jnp.mean(x, axis=-1, keepdims=True)
    var = jnp.mean(jnp.square(x - mu), axis=-1, keepdims=True)
    xn = (x - mu) * jax.lax.rsqrt(var + eps)
    xn = xn * g_ref[...] + b_ref[...]
    y = jnp.dot(xn.astype(w_ref.dtype), w_ref[...],
                preferred_element_type=jnp.float32)
    y = _apply_epilogue(y, bias_ref, act, None)
    o_ref[...] = y.astype(o_ref.dtype)


def _mm_kernel(*refs, act, has_bias, has_res):
    # matmul -> bias -> activation -> residual add, all before the store
    it = iter(refs)
    x_ref = next(it)
    w_ref = next(it)
    bias_ref = next(it) if has_bias else None
    res_ref = next(it) if has_res else None
    o_ref = next(it)
    y = jnp.dot(x_ref[...].astype(w_ref.dtype), w_ref[...],
                preferred_element_type=jnp.float32)
    y = _apply_epilogue(y, bias_ref, act, res_ref)
    o_ref[...] = y.astype(o_ref.dtype)


def _attn_kernel(q_ref, k_ref, v_ref, o_ref, *, scale):
    # One batch element per grid step; all heads batched on the MXU in bf16.
    # Output is written lane-dense as (S, num_heads*hd) -> already (M, C) layout.
    q = q_ref[0]                                   # (H, S, hd) bf16
    k = k_ref[0]
    v = v_ref[0]
    s = jnp.einsum("hqd,hkd->hqk", q, k,
                   preferred_element_type=jnp.float32) * scale
    m = jnp.max(s, axis=-1, keepdims=True)
    p = jnp.exp(s - m)
    denom = jnp.sum(p, axis=-1, keepdims=True)
    p = (p * pl.reciprocal(denom, approx=True)).astype(v.dtype)
    out = jnp.einsum("hqk,hkd->hqd", p, v,
                     preferred_element_type=jnp.float32)   # (H, S, hd) f32
    H, _, D = out.shape
    for h in range(H):                              # static loop: head -> lane slice
        o_ref[0, :, h * D:(h + 1) * D] = out[h].astype(o_ref.dtype)


# ----------------------------- wrappers -----------------------------

def ln_matmul(x, g, b, w, bias=None, act="none", eps=1e-6, out_dtype=jnp.float32):
    """LayerNorm(x) @ w (+ bias) (+ activation). x:(M,K), w:(K,N) bf16."""
    M, K = x.shape
    N = w.shape[1]
    tm, tn = _row_tile(M), _col_tile(N)
    grid = (pl.cdiv(M, tm), pl.cdiv(N, tn))

    in_specs = [
        pl.BlockSpec((tm, K), lambda i, j: (i, 0)),
        pl.BlockSpec((1, K), lambda i, j: (0, 0)),
        pl.BlockSpec((1, K), lambda i, j: (0, 0)),
        pl.BlockSpec((K, tn), lambda i, j: (0, j)),
    ]
    args = [x, g.reshape(1, K), b.reshape(1, K), w]
    if bias is not None:
        in_specs.append(pl.BlockSpec((1, tn), lambda i, j: (0, j)))
        args.append(bias.reshape(1, N))

    return pl.pallas_call(
        functools.partial(_ln_mm_kernel, act=act, eps=eps, has_bias=bias is not None),
        out_shape=jax.ShapeDtypeStruct((M, N), out_dtype),
        grid=grid,
        in_specs=in_specs,
        out_specs=pl.BlockSpec((tm, tn), lambda i, j: (i, j)),
        compiler_params=_compiler_params(2),
    )(*args)


def matmul(x, w, bias=None, residual=None, act="none", out_dtype=jnp.float32):
    """x @ w (+ bias) (+ activation) (+ residual). x:(M,K), w:(K,N) bf16."""
    M, K = x.shape
    N = w.shape[1]
    tm, tn = _row_tile(M), _col_tile(N)
    grid = (pl.cdiv(M, tm), pl.cdiv(N, tn))

    in_specs = [
        pl.BlockSpec((tm, K), lambda i, j: (i, 0)),
        pl.BlockSpec((K, tn), lambda i, j: (0, j)),
    ]
    args = [x, w]
    if bias is not None:
        in_specs.append(pl.BlockSpec((1, tn), lambda i, j: (0, j)))
        args.append(bias.reshape(1, N))
    if residual is not None:
        in_specs.append(pl.BlockSpec((tm, tn), lambda i, j: (i, j)))
        args.append(residual)

    return pl.pallas_call(
        functools.partial(_mm_kernel, act=act, has_bias=bias is not None,
                          has_res=residual is not None),
        out_shape=jax.ShapeDtypeStruct((M, N), out_dtype),
        grid=grid,
        in_specs=in_specs,
        out_specs=pl.BlockSpec((tm, tn), lambda i, j: (i, j)),
        compiler_params=_compiler_params(2),
    )(*args)


def attn_core(q, k, v, scale, out_dtype=jnp.bfloat16):
    """softmax(q k^T * scale) @ v. q/k/v: (B, H, S, hd) bf16 -> (B, S, H*hd)."""
    B, H, S, D = q.shape
    C = H * D
    return pl.pallas_call(
        functools.partial(_attn_kernel, scale=scale),
        out_shape=jax.ShapeDtypeStruct((B, S, C), out_dtype),
        grid=(B,),
        in_specs=[pl.BlockSpec((1, H, S, D), lambda b: (b, 0, 0, 0))] * 3,
        out_specs=pl.BlockSpec((1, S, C), lambda b: (b, 0, 0)),
        compiler_params=_compiler_params(1),
    )(q, k, v)


# ----------------------------- Block forward -----------------------------

def block_forward(p, x, *, num_heads, eps=1e-6):
    B, N, C = x.shape
    hd = C // num_heads
    scale = hd ** (-0.5)
    M = B * N
    x2 = x.reshape(M, C)

    # attention branch: fused LN1 + QKV projection (qkv_bias=False), bf16 output
    qkv = ln_matmul(x2, p["n1_g"], p["n1_b"], p["qkv_w"], bias=None,
                    act="none", eps=eps, out_dtype=jnp.bfloat16)
    # cheap bf16 XLA reshape/transpose for the head split
    qkv = qkv.reshape(B, N, 3, num_heads, hd).transpose(2, 0, 3, 1, 4)  # (3,B,H,N,hd)
    q, k, v = qkv[0], qkv[1], qkv[2]
    # attention writes (B, N, C) lane-dense -> no post-attention transpose
    o = attn_core(q, k, v, scale).reshape(M, C)
    # output projection with bias + residual add fused into the epilogue
    x2 = matmul(o, p["proj_w"], bias=p["proj_b"], residual=x2,
                out_dtype=jnp.float32)

    # MLP branch: fused LN2 + fc1 + bias + exact GELU (bf16 hidden), then
    # fc2 + bias + residual
    h = ln_matmul(x2, p["n2_g"], p["n2_b"], p["fc1_w"], bias=p["fc1_b"],
                  act="gelu", eps=eps, out_dtype=jnp.bfloat16)
    x2 = matmul(h, p["fc2_w"], bias=p["fc2_b"], residual=x2,
                out_dtype=jnp.float32)
    return x2.reshape(B, N, C)


# ----------------------------- params & reference -----------------------------

def init_params(key, dim, mlp_ratio=4.0):
    hidden = int(dim * mlp_ratio)
    keys = iter(jax.random.split(key, 16))

    def nrm(shape, s=0.05):
        return jax.random.normal(next(keys), shape, jnp.float32) * s

    wdt = jnp.bfloat16  # weights stored bf16; MXU accumulates in f32
    return dict(
        n1_g=1.0 + nrm((dim,)), n1_b=nrm((dim,)),
        qkv_w=nrm((dim, 3 * dim)).astype(wdt),   # == torch qkv.weight.T
        proj_w=nrm((dim, dim)).astype(wdt),      # == torch proj.weight.T
        proj_b=nrm((dim,)),
        n2_g=1.0 + nrm((dim,)), n2_b=nrm((dim,)),
        fc1_w=nrm((dim, hidden)).astype(wdt),    # == torch fc1.weight.T
        fc1_b=nrm((hidden,)),
        fc2_w=nrm((hidden, dim)).astype(wdt),    # == torch fc2.weight.T
        fc2_b=nrm((dim,)),
    )


def reference_block(p, x, num_heads, eps=1e-6):
    # pure-JAX reference of Block.forward (same bf16 weights, f32 math)
    B, N, C = x.shape
    hd = C // num_heads

    def ln(v, g, b):
        mu = jnp.mean(v, -1, keepdims=True)
        var = jnp.mean(jnp.square(v - mu), -1, keepdims=True)
        return (v - mu) * jax.lax.rsqrt(var + eps) * g + b

    def attn(v):
        qkv = v @ p["qkv_w"].astype(jnp.float32)
        qkv = qkv.reshape(B, N, 3, num_heads, hd).transpose(2, 0, 3, 1, 4)
        q, k, vv = qkv[0], qkv[1], qkv[2]
        s = jnp.einsum("bhqd,bhkd->bhqk", q, k) * hd ** (-0.5)
        pr = jax.nn.softmax(s, axis=-1)
        o = jnp.einsum("bhqk,bhkd->bhqd", pr, vv)
        o = o.transpose(0, 2, 1, 3).reshape(B, N, C)
        return o @ p["proj_w"].astype(jnp.float32) + p["proj_b"]

    x = x + attn(ln(x, p["n1_g"], p["n1_b"]))
    h = ln(x, p["n2_g"], p["n2_b"])
    h = jax.nn.gelu(h @ p["fc1_w"].astype(jnp.float32) + p["fc1_b"], approximate=False)
    return x + (h @ p["fc2_w"].astype(jnp.float32) + p["fc2_b"])


if __name__ == "__main__":
    B, N, C = 2, 8, 32          # batch, seq len, embed dim
    num_heads = 4
    mlp_ratio = 4.0

    key = jax.random.PRNGKey(0)
    kx, kp = jax.random.split(key)
    x = jax.random.normal(kx, (B, N, C), jnp.float32)
    params = init_params(kp, C, mlp_ratio)

    fwd = jax.jit(functools.partial(block_forward, num_heads=num_heads))
    y = fwd(params, x)
    jax.block_until_ready(y)

    assert y.shape == (B, N, C)
    assert bool(jnp.all(jnp.isfinite(y)))

    y_ref = reference_block(params, x, num_heads)
    max_err = float(jnp.max(jnp.abs(y - y_ref)))
    assert max_err < 1e-1, f"mismatch vs reference: {max_err}"

    print("KERNEL_OK")
</pallas_src>

<mosaic_0001>
module attributes {stable_mosaic.version = 11 : i64} {
  func.func @_ln_mm_kernel(%arg0: i32, %arg1: i32, %arg2: memref<16x32xf32, #tpu.memory_space<vmem>>, %arg3: memref<1x32xf32, #tpu.memory_space<vmem>>, %arg4: memref<1x32xf32, #tpu.memory_space<vmem>>, %arg5: memref<32x96xbf16, #tpu.memory_space<vmem>>, %arg6: memref<16x96xbf16, #tpu.memory_space<vmem>>) attributes {dimension_semantics = [#tpu.dimension_semantics<parallel>, #tpu.dimension_semantics<parallel>], iteration_bounds = array<i64: 1, 1>, scalar_prefetch = 0 : i64, scratch_operands = 0 : i64, tpu.core_type = #tpu.core_type<tc>, window_params = [{transform_indices = @transform_0, window_bounds = array<i64: 16, 32>}, {pipeline_mode = #tpu.pipeline_mode<synchronous>, transform_indices = @transform_1, window_bounds = array<i64: 1, 32>}, {pipeline_mode = #tpu.pipeline_mode<synchronous>, transform_indices = @transform_2, window_bounds = array<i64: 1, 32>}, {transform_indices = @transform_3, window_bounds = array<i64: 32, 96>}, {transform_indices = @transform_4, window_bounds = array<i64: 16, 96>}]} {
    %c0 = arith.constant 0 : index
    %c0_0 = arith.constant 0 : index
    %0 = vector.load %arg2[%c0, %c0_0] : memref<16x32xf32, #tpu.memory_space<vmem>>, vector<16x32xf32>
    %cst = arith.constant dense<0.000000e+00> : vector<16xf32>
    %1 = vector.multi_reduction <add>, %0, %cst [1] : vector<16x32xf32> to vector<16xf32>
    %2 = vector.shape_cast %1 : vector<16xf32> to vector<16x1xf32>
    %cst_1 = arith.constant 3.200000e+01 : f32
    %3 = vector.broadcast %cst_1 : f32 to vector<16x1xf32>
    %4 = arith.divf %2, %3 : vector<16x1xf32>
    %5 = vector.broadcast %4 : vector<16x1xf32> to vector<16x32xf32>
    %6 = arith.subf %0, %5 : vector<16x32xf32>
    %7 = arith.mulf %6, %6 : vector<16x32xf32>
    %cst_2 = arith.constant dense<0.000000e+00> : vector<16xf32>
    %8 = vector.multi_reduction <add>, %7, %cst_2 [1] : vector<16x32xf32> to vector<16xf32>
    %9 = vector.shape_cast %8 : vector<16xf32> to vector<16x1xf32>
    %cst_3 = arith.constant 3.200000e+01 : f32
    %10 = vector.broadcast %cst_3 : f32 to vector<16x1xf32>
    %11 = arith.divf %9, %10 : vector<16x1xf32>
    %12 = vector.broadcast %4 : vector<16x1xf32> to vector<16x32xf32>
    %13 = arith.subf %0, %12 : vector<16x32xf32>
    %cst_4 = arith.constant 9.99999997E-7 : f32
    %14 = vector.broadcast %cst_4 : f32 to vector<16x1xf32>
    %15 = arith.addf %11, %14 : vector<16x1xf32>
    %16 = math.rsqrt %15 : vector<16x1xf32>
    %17 = vector.broadcast %16 : vector<16x1xf32> to vector<16x32xf32>
    %18 = arith.mulf %13, %17 : vector<16x32xf32>
    %c0_5 = arith.constant 0 : index
    %c0_6 = arith.constant 0 : index
    %19 = vector.load %arg3[%c0_5, %c0_6] : memref<1x32xf32, #tpu.memory_space<vmem>>, vector<1x32xf32>
    %20 = vector.broadcast %19 : vector<1x32xf32> to vector<16x32xf32>
    %21 = arith.mulf %18, %20 : vector<16x32xf32>
    %c0_7 = arith.constant 0 : index
    %c0_8 = arith.constant 0 : index
    %22 = vector.load %arg4[%c0_7, %c0_8] : memref<1x32xf32, #tpu.memory_space<vmem>>, vector<1x32xf32>
    %23 = vector.broadcast %22 : vector<1x32xf32> to vector<16x32xf32>
    %24 = arith.addf %21, %23 : vector<16x32xf32>
    %25 = arith.truncf %24 : vector<16x32xf32> to vector<16x32xbf16>
    %c0_9 = arith.constant 0 : index
    %c0_10 = arith.constant 0 : index
    %26 = vector.load %arg5[%c0_9, %c0_10] : memref<32x96xbf16, #tpu.memory_space<vmem>>, vector<32x96xbf16>
    %cst_11 = arith.constant dense<0.000000e+00> : vector<16x96xf32>
    %27 = tpu.matmul %25, %26, %cst_11 {dimension_numbers = #tpu.dot_dimension_numbers<[1], [0], [0], [1], [0, 0, 1, 1], [], []>} : vector<16x32xbf16>, vector<32x96xbf16>, vector<16x96xf32> -> vector<16x96xf32>
    %28 = arith.truncf %27 : vector<16x96xf32> to vector<16x96xbf16>
    %c0_12 = arith.constant 0 : index
    %c0_13 = arith.constant 0 : index
    %29 = vector.load %arg6[%c0_12, %c0_13] : memref<16x96xbf16, #tpu.memory_space<vmem>>, vector<16x96xbf16>
    tpu.vector_store %arg6[%c0_12, %c0_13], %28 {strides = array<i32>} : memref<16x96xbf16, #tpu.memory_space<vmem>>, vector<16x96xbf16>,
    return
  }
  func.func @transform_0(%arg0: i32, %arg1: i32) -> (i32, i32) {
    %c0_i32 = arith.constant 0 : i32
    %c0_i32_0 = arith.constant 0 : i32
    return %arg0, %c0_i32 : i32, i32
  }
  func.func @transform_1(%arg0: i32, %arg1: i32) -> (i32, i32) {
    %c0_i32 = arith.constant 0 : i32
    %c0_i32_0 = arith.constant 0 : i32
    %c0_i32_1 = arith.constant 0 : i32
    return %c0_i32, %c0_i32_0 : i32, i32
  }
  func.func @transform_2(%arg0: i32, %arg1: i32) -> (i32, i32) {
    %c0_i32 = arith.constant 0 : i32
    %c0_i32_0 = arith.constant 0 : i32
    %c0_i32_1 = arith.constant 0 : i32
    return %c0_i32, %c0_i32_0 : i32, i32
  }
  func.func @transform_3(%arg0: i32, %arg1: i32) -> (i32, i32) {
    %c0_i32 = arith.constant 0 : i32
    %c0_i32_0 = arith.constant 0 : i32
    return %c0_i32, %arg1 : i32, i32
  }
  func.func @transform_4(%arg0: i32, %arg1: i32) -> (i32, i32) {
    %c0_i32 = arith.constant 0 : i32
    return %arg0, %arg1 : i32, i32
  }
}

module attributes {stable_mosaic.version = 11 : i64} {
  func.func @_attn_kernel(%arg0: i32, %arg1: memref<1x4x8x8xbf16, #tpu.memory_space<vmem>>, %arg2: memref<1x4x8x8xbf16, #tpu.memory_space<vmem>>, %arg3: memref<1x4x8x8xbf16, #tpu.memory_space<vmem>>, %arg4: memref<1x8x32xbf16, #tpu.memory_space<vmem>>) attributes {dimension_semantics = [#tpu.dimension_semantics<parallel>], iteration_bounds = array<i64: 2>, scalar_prefetch = 0 : i64, scratch_operands = 0 : i64, tpu.core_type = #tpu.core_type<tc>, window_params = [{transform_indices = @transform_0, window_bounds = array<i64: 1, 4, 8, 8>}, {transform_indices = @transform_1, window_bounds = array<i64: 1, 4, 8, 8>}, {transform_indices = @transform_2, window_bounds = array<i64: 1, 4, 8, 8>}, {transform_indices = @transform_3, window_bounds = array<i64: 1, 8, 32>}]} {
    %c0 = arith.constant 0 : index
    %c0_0 = arith.constant 0 : index
    %c0_1 = arith.constant 0 : index
    %c0_2 = arith.constant 0 : index
    %0 = vector.load %arg1[%c0, %c0_0, %c0_1, %c0_2] : memref<1x4x8x8xbf16, #tpu.memory_space<vmem>>, vector<1x4x8x8xbf16>
    %1 = vector.shape_cast %0 : vector<1x4x8x8xbf16> to vector<4x8x8xbf16>
    %c0_3 = arith.constant 0 : index
    %c0_4 = arith.constant 0 : index
    %c0_5 = arith.constant 0 : index
    %c0_6 = arith.constant 0 : index
    %2 = vector.load %arg2[%c0_3, %c0_4, %c0_5, %c0_6] : memref<1x4x8x8xbf16, #tpu.memory_space<vmem>>, vector<1x4x8x8xbf16>
    %3 = vector.shape_cast %2 : vector<1x4x8x8xbf16> to vector<4x8x8xbf16>
    %c0_7 = arith.constant 0 : index
    %c0_8 = arith.constant 0 : index
    %c0_9 = arith.constant 0 : index
    %c0_10 = arith.constant 0 : index
    %4 = vector.load %arg3[%c0_7, %c0_8, %c0_9, %c0_10] : memref<1x4x8x8xbf16, #tpu.memory_space<vmem>>, vector<1x4x8x8xbf16>
    %5 = vector.shape_cast %4 : vector<1x4x8x8xbf16> to vector<4x8x8xbf16>
    "tpu.trace_start"() <{level = 10 : i32, message = "hqd,hkd->hqk"}> : () -> ()
    %cst = arith.constant dense<0.000000e+00> : vector<4x8x8xf32>
    %6 = tpu.matmul %1, %3, %cst {dimension_numbers = #tpu.dot_dimension_numbers<[2], [2], [1], [1], [0, 0, 0, 1, 1, 1], [0], [0]>} : vector<4x8x8xbf16>, vector<4x8x8xbf16>, vector<4x8x8xf32> -> vector<4x8x8xf32>
    "tpu.trace_stop"() : () -> ()
    %cst_11 = arith.constant 0.353553385 : f32
    %7 = vector.broadcast %cst_11 : f32 to vector<4x8x8xf32>
    %8 = arith.mulf %6, %7 : vector<4x8x8xf32>
    %cst_12 = arith.constant dense<0xFF800000> : vector<4x8xf32>
    %9 = vector.multi_reduction <maximumf>, %8, %cst_12 [2] : vector<4x8x8xf32> to vector<4x8xf32>
    %10 = vector.shape_cast %9 : vector<4x8xf32> to vector<4x8x1xf32>
    %11 = vector.broadcast %10 : vector<4x8x1xf32> to vector<4x8x8xf32>
    %12 = arith.subf %8, %11 : vector<4x8x8xf32>
    %13 = math.exp %12 : vector<4x8x8xf32>
    %cst_13 = arith.constant dense<0.000000e+00> : vector<4x8xf32>
    %14 = vector.multi_reduction <add>, %13, %cst_13 [2] : vector<4x8x8xf32> to vector<4x8xf32>
    %15 = vector.shape_cast %14 : vector<4x8xf32> to vector<4x8x1xf32>
    %16 = tpu.reciprocal %15 {approx = true} : vector<4x8x1xf32> -> vector<4x8x1xf32>
    %17 = vector.broadcast %16 : vector<4x8x1xf32> to vector<4x8x8xf32>
    %18 = arith.mulf %13, %17 : vector<4x8x8xf32>
    %19 = arith.truncf %18 : vector<4x8x8xf32> to vector<4x8x8xbf16>
    "tpu.trace_start"() <{level = 10 : i32, message = "hqk,hkd->hqd"}> : () -> ()
    %cst_14 = arith.constant dense<0.000000e+00> : vector<4x8x8xf32>
    %20 = tpu.matmul %19, %5, %cst_14 {dimension_numbers = #tpu.dot_dimension_numbers<[2], [1], [1], [2], [0, 0, 0, 1, 1, 2], [0], [0]>} : vector<4x8x8xbf16>, vector<4x8x8xbf16>, vector<4x8x8xf32> -> vector<4x8x8xf32>
    "tpu.trace_stop"() : () -> ()
    %21 = vector.extract_strided_slice %20 {offsets = [0, 0, 0], sizes = [1, 8, 8], strides = [1, 1, 1]} : vector<4x8x8xf32> to vector<1x8x8xf32>
    %22 = vector.shape_cast %21 : vector<1x8x8xf32> to vector<8x8xf32>
    %23 = arith.truncf %22 : vector<8x8xf32> to vector<8x8xbf16>
    %c0_15 = arith.constant 0 : index
    %c0_16 = arith.constant 0 : index
    %c0_17 = arith.constant 0 : index
    %24 = vector.load %arg4[%c0_15, %c0_16, %c0_17] : memref<1x8x32xbf16, #tpu.memory_space<vmem>>, vector<1x8x8xbf16>
    %25 = vector.shape_cast %24 : vector<1x8x8xbf16> to vector<8x8xbf16>
    %26 = vector.shape_cast %23 : vector<8x8xbf16> to vector<1x8x8xbf16>
    tpu.vector_store %arg4[%c0_15, %c0_16, %c0_17], %26 {strides = array<i32>} : memref<1x8x32xbf16, #tpu.memory_space<vmem>>, vector<1x8x8xbf16>,
    %27 = vector.extract_strided_slice %20 {offsets = [1, 0, 0], sizes = [1, 8, 8], strides = [1, 1, 1]} : vector<4x8x8xf32> to vector<1x8x8xf32>
    %28 = vector.shape_cast %27 : vector<1x8x8xf32> to vector<8x8xf32>
    %29 = arith.truncf %28 : vector<8x8xf32> to vector<8x8xbf16>
    %c0_18 = arith.constant 0 : index
    %c0_19 = arith.constant 0 : index
    %c8 = arith.constant 8 : index
    %30 = vector.load %arg4[%c0_18, %c0_19, %c8] : memref<1x8x32xbf16, #tpu.memory_space<vmem>>, vector<1x8x8xbf16>
    %31 = vector.shape_cast %30 : vector<1x8x8xbf16> to vector<8x8xbf16>
    %32 = vector.shape_cast %29 : vector<8x8xbf16> to vector<1x8x8xbf16>
    tpu.vector_store %arg4[%c0_18, %c0_19, %c8], %32 {strides = array<i32>} : memref<1x8x32xbf16, #tpu.memory_space<vmem>>, vector<1x8x8xbf16>,
    %33 = vector.extract_strided_slice %20 {offsets = [2, 0, 0], sizes = [1, 8, 8], strides = [1, 1, 1]} : vector<4x8x8xf32> to vector<1x8x8xf32>
    %34 = vector.shape_cast %33 : vector<1x8x8xf32> to vector<8x8xf32>
    %35 = arith.truncf %34 : vector<8x8xf32> to vector<8x8xbf16>
    %c0_20 = arith.constant 0 : index
    %c0_21 = arith.constant 0 : index
    %c16 = arith.constant 16 : index
    %36 = vector.load %arg4[%c0_20, %c0_21, %c16] : memref<1x8x32xbf16, #tpu.memory_space<vmem>>, vector<1x8x8xbf16>
    %37 = vector.shape_cast %36 : vector<1x8x8xbf16> to vector<8x8xbf16>
    %38 = vector.shape_cast %35 : vector<8x8xbf16> to vector<1x8x8xbf16>
    tpu.vector_store %arg4[%c0_20, %c0_21, %c16], %38 {strides = array<i32>} : memref<1x8x32xbf16, #tpu.memory_space<vmem>>, vector<1x8x8xbf16>,
    %39 = vector.extract_strided_slice %20 {offsets = [3, 0, 0], sizes = [1, 8, 8], strides = [1, 1, 1]} : vector<4x8x8xf32> to vector<1x8x8xf32>
    %40 = vector.shape_cast %39 : vector<1x8x8xf32> to vector<8x8xf32>
    %41 = arith.truncf %40 : vector<8x8xf32> to vector<8x8xbf16>
    %c0_22 = arith.constant 0 : index
    %c0_23 = arith.constant 0 : index
    %c24 = arith.constant 24 : index
    %42 = vector.load %arg4[%c0_22, %c0_23, %c24] : memref<1x8x32xbf16, #tpu.memory_space<vmem>>, vector<1x8x8xbf16>
    %43 = vector.shape_cast %42 : vector<1x8x8xbf16> to vector<8x8xbf16>
    %44 = vector.shape_cast %41 : vector<8x8xbf16> to vector<1x8x8xbf16>
    tpu.vector_store %arg4[%c0_22, %c0_23, %c24], %44 {strides = array<i32>} : memref<1x8x32xbf16, #tpu.memory_space<vmem>>, vector<1x8x8xbf16>,
    return
  }
  func.func @transform_0(%arg0: i32) -> (i32, i32, i32, i32) {
    %c0_i32 = arith.constant 0 : i32
    %c0_i32_0 = arith.constant 0 : i32
    %c0_i32_1 = arith.constant 0 : i32
    %c0_i32_2 = arith.constant 0 : i32
    return %arg0, %c0_i32, %c0_i32_0, %c0_i32_1 : i32, i32, i32, i32
  }
  func.func @transform_1(%arg0: i32) -> (i32, i32, i32, i32) {
    %c0_i32 = arith.constant 0 : i32
    %c0_i32_0 = arith.constant 0 : i32
    %c0_i32_1 = arith.constant 0 : i32
    %c0_i32_2 = arith.constant 0 : i32
    return %arg0, %c0_i32, %c0_i32_0, %c0_i32_1 : i32, i32, i32, i32
  }
  func.func @transform_2(%arg0: i32) -> (i32, i32, i32, i32) {
    %c0_i32 = arith.constant 0 : i32
    %c0_i32_0 = arith.constant 0 : i32
    %c0_i32_1 = arith.constant 0 : i32
    %c0_i32_2 = arith.constant 0 : i32
    return %arg0, %c0_i32, %c0_i32_0, %c0_i32_1 : i32, i32, i32, i32
  }
  func.func @transform_3(%arg0: i32) -> (i32, i32, i32) {
    %c0_i32 = arith.constant 0 : i32
    %c0_i32_0 = arith.constant 0 : i32
    %c0_i32_1 = arith.constant 0 : i32
    return %arg0, %c0_i32, %c0_i32_0 : i32, i32, i32
  }
}

module attributes {stable_mosaic.version = 11 : i64} {
  func.func @_mm_kernel(%arg0: i32, %arg1: i32, %arg2: memref<16x32xbf16, #tpu.memory_space<vmem>>, %arg3: memref<32x32xbf16, #tpu.memory_space<vmem>>, %arg4: memref<1x32xf32, #tpu.memory_space<vmem>>, %arg5: memref<16x32xf32, #tpu.memory_space<vmem>>, %arg6: memref<16x32xf32, #tpu.memory_space<vmem>>) attributes {dimension_semantics = [#tpu.dimension_semantics<parallel>, #tpu.dimension_semantics<parallel>], iteration_bounds = array<i64: 1, 1>, scalar_prefetch = 0 : i64, scratch_operands = 0 : i64, tpu.core_type = #tpu.core_type<tc>, window_params = [{transform_indices = @transform_0, window_bounds = array<i64: 16, 32>}, {transform_indices = @transform_1, window_bounds = array<i64: 32, 32>}, {transform_indices = @transform_2, window_bounds = array<i64: 1, 32>}, {transform_indices = @transform_3, window_bounds = array<i64: 16, 32>}, {transform_indices = @transform_4, window_bounds = array<i64: 16, 32>}]} {
    %c0 = arith.constant 0 : index
    %c0_0 = arith.constant 0 : index
    %0 = vector.load %arg2[%c0, %c0_0] : memref<16x32xbf16, #tpu.memory_space<vmem>>, vector<16x32xbf16>
    %c0_1 = arith.constant 0 : index
    %c0_2 = arith.constant 0 : index
    %1 = vector.load %arg3[%c0_1, %c0_2] : memref<32x32xbf16, #tpu.memory_space<vmem>>, vector<32x32xbf16>
    %cst = arith.constant dense<0.000000e+00> : vector<16x32xf32>
    %2 = tpu.matmul %0, %1, %cst {dimension_numbers = #tpu.dot_dimension_numbers<[1], [0], [0], [1], [0, 0, 1, 1], [], []>} : vector<16x32xbf16>, vector<32x32xbf16>, vector<16x32xf32> -> vector<16x32xf32>
    %c0_3 = arith.constant 0 : index
    %c0_4 = arith.constant 0 : index
    %3 = vector.load %arg4[%c0_3, %c0_4] : memref<1x32xf32, #tpu.memory_space<vmem>>, vector<1x32xf32>
    %4 = vector.broadcast %3 : vector<1x32xf32> to vector<16x32xf32>
    %5 = arith.addf %2, %4 : vector<16x32xf32>
    %c0_5 = arith.constant 0 : index
    %c0_6 = arith.constant 0 : index
    %6 = vector.load %arg5[%c0_5, %c0_6] : memref<16x32xf32, #tpu.memory_space<vmem>>, vector<16x32xf32>
    %7 = arith.addf %5, %6 : vector<16x32xf32>
    %c0_7 = arith.constant 0 : index
    %c0_8 = arith.constant 0 : index
    %8 = vector.load %arg6[%c0_7, %c0_8] : memref<16x32xf32, #tpu.memory_space<vmem>>, vector<16x32xf32>
    tpu.vector_store %arg6[%c0_7, %c0_8], %7 {strides = array<i32>} : memref<16x32xf32, #tpu.memory_space<vmem>>, vector<16x32xf32>,
    return
  }
  func.func @transform_0(%arg0: i32, %arg1: i32) -> (i32, i32) {
    %c0_i32 = arith.constant 0 : i32
    %c0_i32_0 = arith.constant 0 : i32
    return %arg0, %c0_i32 : i32, i32
  }
  func.func @transform_1(%arg0: i32, %arg1: i32) -> (i32, i32) {
    %c0_i32 = arith.constant 0 : i32
    %c0_i32_0 = arith.constant 0 : i32
    return %c0_i32, %arg1 : i32, i32
  }
  func.func @transform_2(%arg0: i32, %arg1: i32) -> (i32, i32) {
    %c0_i32 = arith.constant 0 : i32
    %c0_i32_0 = arith.constant 0 : i32
    return %c0_i32, %arg1 : i32, i32
  }
  func.func @transform_3(%arg0: i32, %arg1: i32) -> (i32, i32) {
    %c0_i32 = arith.constant 0 : i32
    return %arg0, %arg1 : i32, i32
  }
  func.func @transform_4(%arg0: i32, %arg1: i32) -> (i32, i32) {
    %c0_i32 = arith.constant 0 : i32
    return %arg0, %arg1 : i32, i32
  }
}

module attributes {stable_mosaic.version = 11 : i64} {
  func.func @_ln_mm_kernel(%arg0: i32, %arg1: i32, %arg2: memref<16x32xf32, #tpu.memory_space<vmem>>, %arg3: memref<1x32xf32, #tpu.memory_space<vmem>>, %arg4: memref<1x32xf32, #tpu.memory_space<vmem>>, %arg5: memref<32x128xbf16, #tpu.memory_space<vmem>>, %arg6: memref<1x128xf32, #tpu.memory_space<vmem>>, %arg7: memref<16x128xbf16, #tpu.memory_space<vmem>>) attributes {dimension_semantics = [#tpu.dimension_semantics<parallel>, #tpu.dimension_semantics<parallel>], iteration_bounds = array<i64: 1, 1>, scalar_prefetch = 0 : i64, scratch_operands = 0 : i64, tpu.core_type = #tpu.core_type<tc>, window_params = [{transform_indices = @transform_0, window_bounds = array<i64: 16, 32>}, {pipeline_mode = #tpu.pipeline_mode<synchronous>, transform_indices = @transform_1, window_bounds = array<i64: 1, 32>}, {pipeline_mode = #tpu.pipeline_mode<synchronous>, transform_indices = @transform_2, window_bounds = array<i64: 1, 32>}, {transform_indices = @transform_3, window_bounds = array<i64: 32, 128>}, {transform_indices = @transform_4, window_bounds = array<i64: 1, 128>}, {transform_indices = @transform_5, window_bounds = array<i64: 16, 128>}]} {
    %c0 = arith.constant 0 : index
    %c0_0 = arith.constant 0 : index
    %0 = vector.load %arg2[%c0, %c0_0] : memref<16x32xf32, #tpu.memory_space<vmem>>, vector<16x32xf32>
    %cst = arith.constant dense<0.000000e+00> : vector<16xf32>
    %1 = vector.multi_reduction <add>, %0, %cst [1] : vector<16x32xf32> to vector<16xf32>
    %2 = vector.shape_cast %1 : vector<16xf32> to vector<16x1xf32>
    %cst_1 = arith.constant 3.200000e+01 : f32
    %3 = vector.broadcast %cst_1 : f32 to vector<16x1xf32>
    %4 = arith.divf %2, %3 : vector<16x1xf32>
    %5 = vector.broadcast %4 : vector<16x1xf32> to vector<16x32xf32>
    %6 = arith.subf %0, %5 : vector<16x32xf32>
    %7 = arith.mulf %6, %6 : vector<16x32xf32>
    %cst_2 = arith.constant dense<0.000000e+00> : vector<16xf32>
    %8 = vector.multi_reduction <add>, %7, %cst_2 [1] : vector<16x32xf32> to vector<16xf32>
    %9 = vector.shape_cast %8 : vector<16xf32> to vector<16x1xf32>
    %cst_3 = arith.constant 3.200000e+01 : f32
    %10 = vector.broadcast %cst_3 : f32 to vector<16x1xf32>
    %11 = arith.divf %9, %10 : vector<16x1xf32>
    %12 = vector.broadcast %4 : vector<16x1xf32> to vector<16x32xf32>
    %13 = arith.subf %0, %12 : vector<16x32xf32>
    %cst_4 = arith.constant 9.99999997E-7 : f32
    %14 = vector.broadcast %cst_4 : f32 to vector<16x1xf32>
    %15 = arith.addf %11, %14 : vector<16x1xf32>
    %16 = math.rsqrt %15 : vector<16x1xf32>
    %17 = vector.broadcast %16 : vector<16x1xf32> to vector<16x32xf32>
    %18 = arith.mulf %13, %17 : vector<16x32xf32>
    %c0_5 = arith.constant 0 : index
    %c0_6 = arith.constant 0 : index
    %19 = vector.load %arg3[%c0_5, %c0_6] : memref<1x32xf32, #tpu.memory_space<vmem>>, vector<1x32xf32>
    %20 = vector.broadcast %19 : vector<1x32xf32> to vector<16x32xf32>
    %21 = arith.mulf %18, %20 : vector<16x32xf32>
    %c0_7 = arith.constant 0 : index
    %c0_8 = arith.constant 0 : index
    %22 = vector.load %arg4[%c0_7, %c0_8] : memref<1x32xf32, #tpu.memory_space<vmem>>, vector<1x32xf32>
    %23 = vector.broadcast %22 : vector<1x32xf32> to vector<16x32xf32>
    %24 = arith.addf %21, %23 : vector<16x32xf32>
    %25 = arith.truncf %24 : vector<16x32xf32> to vector<16x32xbf16>
    %c0_9 = arith.constant 0 : index
    %c0_10 = arith.constant 0 : index
    %26 = vector.load %arg5[%c0_9, %c0_10] : memref<32x128xbf16, #tpu.memory_space<vmem>>, vector<32x128xbf16>
    %cst_11 = arith.constant dense<0.000000e+00> : vector<16x128xf32>
    %27 = tpu.matmul %25, %26, %cst_11 {dimension_numbers = #tpu.dot_dimension_numbers<[1], [0], [0], [1], [0, 0, 1, 1], [], []>} : vector<16x32xbf16>, vector<32x128xbf16>, vector<16x128xf32> -> vector<16x128xf32>
    %c0_12 = arith.constant 0 : index
    %c0_13 = arith.constant 0 : index
    %28 = vector.load %arg6[%c0_12, %c0_13] : memref<1x128xf32, #tpu.memory_space<vmem>>, vector<1x128xf32>
    %29 = vector.broadcast %28 : vector<1x128xf32> to vector<16x128xf32>
    %30 = arith.addf %27, %29 : vector<16x128xf32>
    %cst_14 = arith.constant 5.000000e-01 : f32
    %31 = vector.broadcast %cst_14 : f32 to vector<16x128xf32>
    %32 = arith.mulf %31, %30 : vector<16x128xf32>
    %cst_15 = arith.constant 0.707106769 : f32
    %33 = vector.broadcast %cst_15 : f32 to vector<16x128xf32>
    %34 = arith.mulf %30, %33 : vector<16x128xf32>
    %cst_16 = arith.constant 0.000000e+00 : f32
    %35 = vector.broadcast %cst_16 : f32 to vector<16x128xf32>
    %36 = arith.cmpf oge, %34, %35 : vector<16x128xf32>
    %cst_17 = arith.constant 1.000000e+00 : f32
    %cst_18 = arith.constant -1.000000e+00 : f32
    %37 = vector.broadcast %cst_17 : f32 to vector<16x128xf32>
    %38 = vector.broadcast %cst_18 : f32 to vector<16x128xf32>
    %39 = arith.select %36, %37, %38 : vector<16x128xi1>, vector<16x128xf32>
    %40 = math.absf %34 : vector<16x128xf32>
    %cst_19 = arith.constant 0.327591091 : f32
    %41 = vector.broadcast %cst_19 : f32 to vector<16x128xf32>
    %42 = arith.mulf %41, %40 : vector<16x128xf32>
    %cst_20 = arith.constant 1.000000e+00 : f32
    %43 = vector.broadcast %cst_20 : f32 to vector<16x128xf32>
    %44 = arith.addf %43, %42 : vector<16x128xf32>
    %45 = tpu.reciprocal %44 {approx = true} : vector<16x128xf32> -> vector<16x128xf32>
    %cst_21 = arith.constant 1.06140542 : f32
    %46 = vector.broadcast %cst_21 : f32 to vector<16x128xf32>
    %47 = arith.mulf %46, %45 : vector<16x128xf32>
    %cst_22 = arith.constant -1.45315206 : f32
    %48 = vector.broadcast %cst_22 : f32 to vector<16x128xf32>
    %49 = arith.addf %47, %48 : vector<16x128xf32>
    %50 = arith.mulf %49, %45 : vector<16x128xf32>
    %cst_23 = arith.constant 1.42141378 : f32
    %51 = vector.broadcast %cst_23 : f32 to vector<16x128xf32>
    %52 = arith.addf %50, %51 : vector<16x128xf32>
    %53 = arith.mulf %52, %45 : vector<16x128xf32>
    %cst_24 = arith.constant -0.284496725 : f32
    %54 = vector.broadcast %cst_24 : f32 to vector<16x128xf32>
    %55 = arith.addf %53, %54 : vector<16x128xf32>
    %56 = arith.mulf %55, %45 : vector<16x128xf32>
    %cst_25 = arith.constant 0.254829586 : f32
    %57 = vector.broadcast %cst_25 : f32 to vector<16x128xf32>
    %58 = arith.addf %56, %57 : vector<16x128xf32>
    %59 = arith.mulf %58, %45 : vector<16x128xf32>
    %cst_26 = arith.constant 0.000000e+00 : f32
    %60 = vector.broadcast %cst_26 : f32 to vector<16x128xf32>
    %61 = arith.subf %60, %40 : vector<16x128xf32>
    %62 = arith.mulf %61, %40 : vector<16x128xf32>
    %63 = math.exp %62 : vector<16x128xf32>
    %64 = arith.mulf %59, %63 : vector<16x128xf32>
    %cst_27 = arith.constant 1.000000e+00 : f32
    %65 = vector.broadcast %cst_27 : f32 to vector<16x128xf32>
    %66 = arith.subf %65, %64 : vector<16x128xf32>
    %67 = arith.mulf %39, %66 : vector<16x128xf32>
    %cst_28 = arith.constant 1.000000e+00 : f32
    %68 = vector.broadcast %cst_28 : f32 to vector<16x128xf32>
    %69 = arith.addf %68, %67 : vector<16x128xf32>
    %70 = arith.mulf %32, %69 : vector<16x128xf32>
    %71 = arith.truncf %70 : vector<16x128xf32> to vector<16x128xbf16>
    %c0_29 = arith.constant 0 : index
    %c0_30 = arith.constant 0 : index
    %72 = vector.load %arg7[%c0_29, %c0_30] : memref<16x128xbf16, #tpu.memory_space<vmem>>, vector<16x128xbf16>
    tpu.vector_store %arg7[%c0_29, %c0_30], %71 {strides = array<i32>} : memref<16x128xbf16, #tpu.memory_space<vmem>>, vector<16x128xbf16>,
    return
  }
  func.func @transform_0(%arg0: i32, %arg1: i32) -> (i32, i32) {
    %c0_i32 = arith.constant 0 : i32
    %c0_i32_0 = arith.constant 0 : i32
    return %arg0, %c0_i32 : i32, i32
  }
  func.func @transform_1(%arg0: i32, %arg1: i32) -> (i32, i32) {
    %c0_i32 = arith.constant 0 : i32
    %c0_i32_0 = arith.constant 0 : i32
    %c0_i32_1 = arith.constant 0 : i32
    return %c0_i32, %c0_i32_0 : i32, i32
  }
  func.func @transform_2(%arg0: i32, %arg1: i32) -> (i32, i32) {
    %c0_i32 = arith.constant 0 : i32
    %c0_i32_0 = arith.constant 0 : i32
    %c0_i32_1 = arith.constant 0 : i32
    return %c0_i32, %c0_i32_0 : i32, i32
  }
  func.func @transform_3(%arg0: i32, %arg1: i32) -> (i32, i32) {
    %c0_i32 = arith.constant 0 : i32
    %c0_i32_0 = arith.constant 0 : i32
    return %c0_i32, %arg1 : i32, i32
  }
  func.func @transform_4(%arg0: i32, %arg1: i32) -> (i32, i32) {
    %c0_i32 = arith.constant 0 : i32
    %c0_i32_0 = arith.constant 0 : i32
    return %c0_i32, %arg1 : i32, i32
  }
  func.func @transform_5(%arg0: i32, %arg1: i32) -> (i32, i32) {
    %c0_i32 = arith.constant 0 : i32
    return %arg0, %arg1 : i32, i32
  }
}

module attributes {stable_mosaic.version = 11 : i64} {
  func.func @_mm_kernel(%arg0: i32, %arg1: i32, %arg2: memref<16x128xbf16, #tpu.memory_space<vmem>>, %arg3: memref<128x32xbf16, #tpu.memory_space<vmem>>, %arg4: memref<1x32xf32, #tpu.memory_space<vmem>>, %arg5: memref<16x32xf32, #tpu.memory_space<vmem>>, %arg6: memref<16x32xf32, #tpu.memory_space<vmem>>) attributes {dimension_semantics = [#tpu.dimension_semantics<parallel>, #tpu.dimension_semantics<parallel>], iteration_bounds = array<i64: 1, 1>, scalar_prefetch = 0 : i64, scratch_operands = 0 : i64, tpu.core_type = #tpu.core_type<tc>, window_params = [{transform_indices = @transform_0, window_bounds = array<i64: 16, 128>}, {transform_indices = @transform_1, window_bounds = array<i64: 128, 32>}, {transform_indices = @transform_2, window_bounds = array<i64: 1, 32>}, {transform_indices = @transform_3, window_bounds = array<i64: 16, 32>}, {transform_indices = @transform_4, window_bounds = array<i64: 16, 32>}]} {
    %c0 = arith.constant 0 : index
    %c0_0 = arith.constant 0 : index
    %0 = vector.load %arg2[%c0, %c0_0] : memref<16x128xbf16, #tpu.memory_space<vmem>>, vector<16x128xbf16>
    %c0_1 = arith.constant 0 : index
    %c0_2 = arith.constant 0 : index
    %1 = vector.load %arg3[%c0_1, %c0_2] : memref<128x32xbf16, #tpu.memory_space<vmem>>, vector<128x32xbf16>
    %cst = arith.constant dense<0.000000e+00> : vector<16x32xf32>
    %2 = tpu.matmul %0, %1, %cst {dimension_numbers = #tpu.dot_dimension_numbers<[1], [0], [0], [1], [0, 0, 1, 1], [], []>} : vector<16x128xbf16>, vector<128x32xbf16>, vector<16x32xf32> -> vector<16x32xf32>
    %c0_3 = arith.constant 0 : index
    %c0_4 = arith.constant 0 : index
    %3 = vector.load %arg4[%c0_3, %c0_4] : memref<1x32xf32, #tpu.memory_space<vmem>>, vector<1x32xf32>
    %4 = vector.broadcast %3 : vector<1x32xf32> to vector<16x32xf32>
    %5 = arith.addf %2, %4 : vector<16x32xf32>
    %c0_5 = arith.constant 0 : index
    %c0_6 = arith.constant 0 : index
    %6 = vector.load %arg5[%c0_5, %c0_6] : memref<16x32xf32, #tpu.memory_space<vmem>>, vector<16x32xf32>
    %7 = arith.addf %5, %6 : vector<16x32xf32>
    %c0_7 = arith.constant 0 : index
    %c0_8 = arith.constant 0 : index
    %8 = vector.load %arg6[%c0_7, %c0_8] : memref<16x32xf32, #tpu.memory_space<vmem>>, vector<16x32xf32>
    tpu.vector_store %arg6[%c0_7, %c0_8], %7 {strides = array<i32>} : memref<16x32xf32, #tpu.memory_space<vmem>>, vector<16x32xf32>,
    return
  }
  func.func @transform_0(%arg0: i32, %arg1: i32) -> (i32, i32) {
    %c0_i32 = arith.constant 0 : i32
    %c0_i32_0 = arith.constant 0 : i32
    return %arg0, %c0_i32 : i32, i32
  }
  func.func @transform_1(%arg0: i32, %arg1: i32) -> (i32, i32) {
    %c0_i32 = arith.constant 0 : i32
    %c0_i32_0 = arith.constant 0 : i32
    return %c0_i32, %arg1 : i32, i32
  }
  func.func @transform_2(%arg0: i32, %arg1: i32) -> (i32, i32) {
    %c0_i32 = arith.constant 0 : i32
    %c0_i32_0 = arith.constant 0 : i32
    return %c0_i32, %arg1 : i32, i32
  }
  func.func @transform_3(%arg0: i32, %arg1: i32) -> (i32, i32) {
    %c0_i32 = arith.constant 0 : i32
    return %arg0, %arg1 : i32, i32
  }
  func.func @transform_4(%arg0: i32, %arg1: i32) -> (i32, i32) {
    %c0_i32 = arith.constant 0 : i32
    return %arg0, %arg1 : i32, i32
  }
}

</mosaic_0001>

<llo_original>
// kernel: block_forward.5
$region0: #{block_forward.5}
  #allocation0 [shape = 'u32[]', space=smem, size = 0x4, offset = 0x4, fixed_abs, tag = 'smem constant byte address 0x4 - core index']
  #allocation1 [shape = 'u32[72,128]{1,0:T(1,128)}', space=vmem, size = 0x9000, scoped, tag = 'internal scratch']
  %s0 = inlined_call_operand.hbm [shape: f32[16,32], index: 0, kind: input, shape index: {}]
  %s1 = inlined_call_operand.vmem [shape: f32[1,32], index: 1, kind: input, shape index: {}]
  %s2 = inlined_call_operand.vmem [shape: f32[1,32], index: 2, kind: input, shape index: {}]
  %s3 = inlined_call_operand.hbm [shape: bf16[32,96], index: 3, kind: input, shape index: {}]
  %s4 = inlined_call_operand.vmem [shape: bf16[16,96], index: 4, kind: output, shape index: {}]
  %s5 = sld [smem:[#allocation0]]
  $region34: #{block_forward.5} parent=0
    _
  %s7 = ssub.s32 1, %s5
  %s8 = scalar_select 0, %s7, %s5
  $region1: #{block_forward.5} parent=0
    #allocation2 [shape = 'u8[8192]{0}', space=vmem, size = 0x2000, scoped, tag = 'input window, operand 0, single buffered']
    #allocation3 [shape = 's32[1]{0}', space=sflag, size = 0x4, scoped, tag = 'scoped memory for block_forward.5']
    #allocation4 [shape = 'u8[8192]{0}', space=vmem, size = 0x2000, scoped, tag = 'input window, operand 3, single buffered']
    #allocation5 [shape = 's32[1]{0}', space=sflag, size = 0x4, scoped, tag = 'scoped memory for block_forward.5']
    %9 = vsyncpa [#allocation3], 0
    %10 = vsyncpa [#allocation5], 0
    // Predicated region
    $region2: #{block_forward.5} parent=1 // pred_check
      _
    $region3: #{block_forward.5} parent=1 // pred_check_branch
      %12 = sbr.rel (0) target = $region5
    $region4: #{block_forward.5} parent=1 // pred_region
      %14 = vsyncadd [#allocation3], 0
      %s15 = sshll.u32 %s0, 4
      %s16 = int_to_ptr.hbm [resolvable:$true] %s15
      %s17 = sshll.u32 [#allocation2], 4
      %s18 = int_to_ptr.vmem [resolvable:$true] %s17
      %23 = dma.hbm_to_vmem [thread:$0]  %s16, 256, %s18, [#allocation3], 128, 128, 8
    $region5: #{block_forward.5} parent=1 // pred_fallthru
      _
    // Predicated region
    $region6: #{block_forward.5} parent=1 // pred_check
      _
    $region7: #{block_forward.5} parent=1 // pred_check_branch
      %25 = sbr.rel (0) target = $region9
    $region8: #{block_forward.5} parent=1 // pred_region
      _
    $region9: #{block_forward.5} parent=1 // pred_fallthru
      _
    // Predicated region
    $region10: #{block_forward.5} parent=1 // pred_check
      _
    $region11: #{block_forward.5} parent=1 // pred_check_branch
      %27 = sbr.rel (0) target = $region13
    $region12: #{block_forward.5} parent=1 // pred_region
      _
    $region13: #{block_forward.5} parent=1 // pred_fallthru
      _
    // Predicated region
    $region14: #{block_forward.5} parent=1 // pred_check
      _
    $region15: #{block_forward.5} parent=1 // pred_check_branch
      %29 = sbr.rel (0) target = $region17
    $region16: #{block_forward.5} parent=1 // pred_region
      %31 = vsyncadd [#allocation5], 0
      %s32 = sshll.u32 %s3, 4
      %s33 = int_to_ptr.hbm [resolvable:$true] %s32
      %s34 = sshll.u32 [#allocation4], 4
      %s35 = int_to_ptr.vmem [resolvable:$true] %s34
      %40 = dma.hbm_to_vmem [thread:$0]  %s33, 256, %s35, [#allocation5], 64, 64, 4
    $region17: #{block_forward.5} parent=1 // pred_fallthru
      _
    // Predicated region
    $region18: #{block_forward.5} parent=1 // pred_check
      _
    $region19: #{block_forward.5} parent=1 // pred_check_branch
      %42 = sbr.rel (0) target = $region21
    $region20: #{block_forward.5} parent=1 // pred_region
      %44 = dma.done [#allocation3], 256
    $region21: #{block_forward.5} parent=1 // pred_fallthru
      _
    // Predicated region
    $region22: #{block_forward.5} parent=1 // pred_check
      _
    $region23: #{block_forward.5} parent=1 // pred_check_branch
      %46 = sbr.rel (0) target = $region25
    $region24: #{block_forward.5} parent=1 // pred_region
      %48 = dma.done [#allocation5], 256
    $region25: #{block_forward.5} parent=1 // pred_fallthru
      _
    %v50 = vld [vmem:[#allocation2] sm:$0xff]
    %v51 = vld [vmem:[#allocation2 + $0x8] sm:$0xff]
    %vm52 = vcmask 261120
    %v53 = vsel %vm52, %v50, 0.0
    %54 = vadd.xlane.f32.xlu0 %v53
    %v55 = vpop.xlane.xlu0 %54
    %v56 = vsel %vm52, %v51, 0.0
    %57 = vadd.xlane.f32.xlu0 %v56
    %v58 = vpop.xlane.xlu0 %57
    %v59 = vrcp.pop 32.0
    %v60 = vmul.f32 32.0, %v59
    %v61 = vsub.f32 1.0, %v60
    %v62 = vmul.f32 %v59, %v61
    %v63 = vadd.f32 %v59, %v62
    %vm64 = vweird.f32 %v59
    %v65 = vsel %vm64, %v59, %v63
    %v66 = vmul.f32 %v55, %v65
    %v67 = vmul.f32 %v58, %v65
    %v68 = vsub.f32 %v50, %v66
    %v69 = vsub.f32 %v51, %v67
    %v70 = vmul.f32 %v68, %v68
    %v71 = vmul.f32 %v69, %v69
    %v72 = vsel %vm52, %v70, 0.0
    %73 = vadd.xlane.f32.xlu0 %v72
    %v74 = vpop.xlane.xlu0 %73
    %v75 = vsel %vm52, %v71, 0.0
    %76 = vadd.xlane.f32.xlu0 %v75
    %v77 = vpop.xlane.xlu0 %76
    %v78 = vmul.f32 %v74, %v65
    %v79 = vmul.f32 %v77, %v65
    %v80 = vadd.f32 %v78, 1e-06
    %v81 = vadd.f32 %v79, 1e-06
    %v82 = vrsqrt.pop %v80
    %v83 = vmul.f32 %v82, %v80
    %v84 = vmul.f32 %v83, %v82
    %v85 = vmul.f32 0.5, %v84
    %v86 = vsub.f32 1.5, %v85
    %v87 = vmul.f32 %v82, %v86
    %vm88 = vweird.f32 %v80
    %vm89 = vweird.f32 %v82
    %vm90 = vmor %vm88, %vm89
    %v91 = vsel %vm90, %v82, %v87
    %v92 = vrsqrt.pop %v81
    %v93 = vmul.f32 %v92, %v81
    %v94 = vmul.f32 %v93, %v92
    %v95 = vmul.f32 0.5, %v94
    %v96 = vsub.f32 1.5, %v95
    %v97 = vmul.f32 %v92, %v96
    %vm98 = vweird.f32 %v81
    %vm99 = vweird.f32 %v92
    %vm100 = vmor %vm98, %vm99
    %v101 = vsel %vm100, %v92, %v97
    %v102 = vmul.f32 %v68, %v91
    %v103 = vmul.f32 %v69, %v101
    %v104 = vld [vmem:[%s1] sm:$0x1]
    %v106 = vperm.slane %v104, 0
    %v108 = vmul.f32 %v102, %v106
    %v109 = vmul.f32 %v103, %v106
    %v110 = vld [vmem:[%s2] sm:$0x1]
    %v112 = vperm.slane %v110, 0
    %v114 = vadd.f32 %v108, %v112
    %v115 = vadd.f32 %v109, %v112
    %v116 = vpack.c.bf16 %v115, %v114
    %v117 = vld [vmem:[#allocation4] sm:$0xf]
    %v118 = vld [vmem:[#allocation4 + $0x4] sm:$0xf]
    %v119 = vld [vmem:[#allocation4 + $0x8] sm:$0xf]
    %v120 = vld [vmem:[#allocation4 + $0xc] sm:$0xf]
    %v125 = vunpack.c.l.b16 %v117
    %v126 = vunpack.c.l.b16 %v118
    %v127 = vunpack.c.l.b16 %v119
    %v128 = vunpack.c.l.b16 %v120
    %v129 = vpack.c.b16 %v126, %v125
    %v130 = vpack.c.b16 %v128, %v127
    %v134 = vsel %vm52, %v116, 0
    %136 = vmatpush.bf16.msra.mxu0 0
    %137 = vmatpush.bf16.msra.mxu0 0
    %138 = vmatpush.bf16.msra.mxu0 0
    %139 = vmatpush.bf16.msra.mxu0 0
    %140 = vmatpush.bf16.msra.mxu0 0
    %141 = vmatpush.bf16.msra.mxu0 0
    %142 = vmatpush.bf16.msra.mxu0 %v130
    %143 = vmatpush.bf16.msra.mxu0 %v129
    %144 = vmatmul.bf16.gmra.mxu0 %v134
    %v145 = vpop.f32.mrf.mxu0
    %v146 = vadd.f32 0.0, %v145
    %v147 = vpop.f32.mrf.mxu0
    %v148 = vadd.f32 0.0, %v147
    %149 = vdwg.mxu0
    %v150 = vpack.c.bf16 %v146, %v146
    %v151 = vpack.c.bf16 %v148, %v148
    %vm152 = vcmask 781312
    %153 = vst.msk [vmem:[%s4] sm:$0xf] %vm152, %v150
    %154 = vst.msk [vmem:[%s4 + $0x4] sm:$0xf] %vm152, %v151
    // Predicated region
    $region26: #{block_forward.5} parent=1 // pred_check
      _
    $region27: #{block_forward.5} parent=1 // pred_check_branch
      %156 = sbr.rel (0) target = $region29
    $region28: #{block_forward.5} parent=1 // pred_region
      _
    $region29: #{block_forward.5} parent=1 // pred_fallthru
      _
    // Predicated region
    $region30: #{block_forward.5} parent=1 // pred_check
      _
    $region31: #{block_forward.5} parent=1 // pred_check_branch
      %158 = sbr.rel (0) target = $region33
    $region32: #{block_forward.5} parent=1 // pred_region
      _
    $region33: #{block_forward.5} parent=1 // pred_fallthru
      _
    %159 = vsyncpa [#allocation3], 1
    %160 = vsyncpa [#allocation5], 1

// kernel: block_forward.7
$region0: #{block_forward.7}
  #allocation0 [shape = 'u32[]', space=smem, size = 0x4, offset = 0x4, fixed_abs, tag = 'smem constant byte address 0x4 - core index']
  #allocation1 [shape = 'u32[72,128]{1,0:T(1,128)}', space=vmem, size = 0x9000, scoped, tag = 'internal scratch']
  %s0 = inlined_call_operand.vmem [shape: bf16[16,32], index: 0, kind: input, shape index: {}]
  %s1 = inlined_call_operand.vmem [shape: bf16[32,32], index: 1, kind: input, shape index: {}]
  %s2 = inlined_call_operand.vmem [shape: f32[1,32], index: 2, kind: input, shape index: {}]
  %s3 = inlined_call_operand.vmem [shape: f32[16,32], index: 3, kind: input, shape index: {}]
  %s4 = inlined_call_operand.vmem [shape: f32[16,32], index: 4, kind: output, shape index: {}]
  %s5 = sld [smem:[#allocation0]]
  $region26: #{block_forward.7} parent=0
    _
  %s7 = ssub.s32 1, %s5
  %s8 = scalar_select 0, %s7, %s5
  // Predicated region
  $region2: #{block_forward.7} parent=0 // pred_check
    _
  $region3: #{block_forward.7} parent=0 // pred_check_branch
    %10 = sbr.rel (0) target = $region5
  $region4: #{block_forward.7} parent=0 // pred_region
    _
  $region5: #{block_forward.7} parent=0 // pred_fallthru
    _
  // Predicated region
  $region6: #{block_forward.7} parent=0 // pred_check
    _
  $region7: #{block_forward.7} parent=0 // pred_check_branch
    %12 = sbr.rel (0) target = $region9
  $region8: #{block_forward.7} parent=0 // pred_region
    _
  $region9: #{block_forward.7} parent=0 // pred_fallthru
    _
  // Predicated region
  $region10: #{block_forward.7} parent=0 // pred_check
    _
  $region11: #{block_forward.7} parent=0 // pred_check_branch
    %14 = sbr.rel (0) target = $region13
  $region12: #{block_forward.7} parent=0 // pred_region
    _
  $region13: #{block_forward.7} parent=0 // pred_fallthru
    _
  // Predicated region
  $region14: #{block_forward.7} parent=0 // pred_check
    _
  $region15: #{block_forward.7} parent=0 // pred_check_branch
    %16 = sbr.rel (0) target = $region17
  $region16: #{block_forward.7} parent=0 // pred_region
    _
  $region17: #{block_forward.7} parent=0 // pred_fallthru
    _
  %v18 = vld [vmem:[%s0] sm:$0xf]
  %v19 = vld [vmem:[%s0 + $0x4] sm:$0xf]
  %v20 = vld [vmem:[%s1] sm:$0xf]
  %v21 = vld [vmem:[%s1 + $0x4] sm:$0xf]
  %v22 = vld [vmem:[%s1 + $0x8] sm:$0xf]
  %v23 = vld [vmem:[%s1 + $0xc] sm:$0xf]
  %v24 = vld [vmem:[%s2] sm:$0x1]
  %v26 = vperm.slane %v24, 0
  %v30 = vunpack.c.l.b16 %v18
  %v31 = vunpack.c.l.b16 %v19
  %v32 = vpack.c.b16 %v31, %v30
  %v37 = vunpack.c.l.b16 %v20
  %v38 = vunpack.c.l.b16 %v21
  %v39 = vunpack.c.l.b16 %v22
  %v40 = vunpack.c.l.b16 %v23
  %v41 = vpack.c.b16 %v38, %v37
  %v42 = vpack.c.b16 %v40, %v39
  %vm45 = vcmask 261120
  %v47 = vsel %vm45, %v32, 0
  %49 = vmatpush.bf16.msra.mxu0 0
  %50 = vmatpush.bf16.msra.mxu0 0
  %51 = vmatpush.bf16.msra.mxu0 0
  %52 = vmatpush.bf16.msra.mxu0 0
  %53 = vmatpush.bf16.msra.mxu0 0
  %54 = vmatpush.bf16.msra.mxu0 0
  %55 = vmatpush.bf16.msra.mxu0 %v42
  %56 = vmatpush.bf16.msra.mxu0 %v41
  %57 = vmatmul.bf16.gmra.mxu0 %v47
  %v58 = vpop.f32.mrf.mxu0
  %v59 = vadd.f32 %v26, %v58
  %v60 = vpop.f32.mrf.mxu0
  %v61 = vadd.f32 %v26, %v60
  %62 = vdwg.mxu0
  %v63 = vld [vmem:[%s3] sm:$0xff]
  %v64 = vld [vmem:[%s3 + $0x8] sm:$0xff]
  %v65 = vadd.f32 %v59, %v63
  %v66 = vadd.f32 %v61, %v64
  %67 = vst.msk [vmem:[%s4] sm:$0xff] %vm45, %v65
  %68 = vst.msk [vmem:[%s4 + $0x8] sm:$0xff] %vm45, %v66
  // Predicated region
  $region18: #{block_forward.7} parent=0 // pred_check
    _
  $region19: #{block_forward.7} parent=0 // pred_check_branch
    %70 = sbr.rel (0) target = $region21
  $region20: #{block_forward.7} parent=0 // pred_region
    _
  $region21: #{block_forward.7} parent=0 // pred_fallthru
    _
  // Predicated region
  $region22: #{block_forward.7} parent=0 // pred_check
    _
  $region23: #{block_forward.7} parent=0 // pred_check_branch
    %72 = sbr.rel (0) target = $region25
  $region24: #{block_forward.7} parent=0 // pred_region
    _
  $region25: #{block_forward.7} parent=0 // pred_fallthru
    _

// kernel: block_forward.6
$region0: #{block_forward.6}
  #allocation0 [shape = 'u32[]', space=smem, size = 0x4, offset = 0x4, fixed_abs, tag = 'smem constant byte address 0x4 - core index']
  #allocation1 [shape = 'u32[72,128]{1,0:T(1,128)}', space=vmem, size = 0x9000, scoped, tag = 'internal scratch']
  %s0 = inlined_call_operand.vmem [shape: bf16[2,4,8,8], index: 0, kind: input, shape index: {}]
  %s1 = inlined_call_operand.vmem [shape: bf16[2,4,8,8], index: 1, kind: input, shape index: {}]
  %s2 = inlined_call_operand.vmem [shape: bf16[2,4,8,8], index: 2, kind: input, shape index: {}]
  %s3 = inlined_call_operand.vmem [shape: bf16[2,8,32], index: 3, kind: output, shape index: {}]
  %s4 = sld [smem:[#allocation0]]
  $region45: #{block_forward.6} parent=0
    _
  %s6 = ssub.s32 1, %s4
  %s7 = scalar_select 0, %s6, %s4
  loop: start=0, step=1, limit=4
  $region2: #{block_forward.6} parent=0 // loop_pre_header
    _
  $region3: #{block_forward.6} parent=0 // loop_header
    %s9 = sphi 0, %s13
    %p10 = scmp.ge.s32.totalorder %s9, 4
    %s19 = sphi 0, %s21
    %s22 = sphi 0, %s19
    %s23 = sphi 0, %s22
    %s39 = sphi 0, %s23
    %s45 = sphi 0, %s47
    %s48 = sphi 0, %s45
    %s49 = sphi 0, %s48
    %s65 = sphi 0, %s49
    %s71 = sphi 0, %s73
    %s74 = sphi 0, %s71
    %s75 = sphi 0, %s74
    %s91 = sphi 0, %s75
    %s97 = sphi 0, %s99
    %s100 = sphi 0, %s97
    %s101 = sphi 0, %s100
    %s117 = sphi 0, %s101
  $region4: #{block_forward.6} parent=0 // loop_header_branch
    %12 = sbr.rel (%p10) target = $region8
  $region5: #{block_forward.6} parent=0 // loop_body
    %s14 = ssub.s32 %s9, 1
    %s15 = ssub.s32 %s9, 2
    %s16 = sadd.s32 %s9, 1
    %s17 = ssub.s32 %s9, %s16
    %p18 = scmp.eq.s32.totalorder %s17, 0
    %s20 = sadd.s32 %s19, 1
    %s21 = scalar_select %p18, %s19, %s20
    %p24 = pneg %p18
    %p25 = scmp.eq.s32.totalorder %s9, 1
    %p26 = por %p24, %p25
    %p27 = scmp.ne.s32.totalorder %s19, %s22
    %p28 = scmp.eq.s32.totalorder %s9, 0
    %p29 = por %p27, %p28
    %p30 = scmp.ne.s32.totalorder %s19, %s22
    %p31 = scmp.eq.s32.totalorder %s14, 1
    %p32 = por %p30, %p31
    %p33 = scmp.ne.s32.totalorder %s22, %s23
    %p34 = scmp.eq.s32.totalorder %s14, 0
    %p35 = por %p33, %p34
    %p36 = scmp.ne.s32.totalorder %s22, %s23
    %p37 = scmp.eq.s32.totalorder %s15, 1
    %p38 = por %p36, %p37
    %p40 = scmp.ne.s32.totalorder %s23, %s39
    %p41 = scmp.eq.s32.totalorder %s15, 0
    %p42 = por %p40, %p41
    %s43 = ssub.s32 %s9, %s16
    %p44 = scmp.eq.s32.totalorder %s43, 0
    %s46 = sadd.s32 %s45, 1
    %s47 = scalar_select %p44, %s45, %s46
    %p50 = pneg %p44
    %p51 = scmp.eq.s32.totalorder %s9, 1
    %p52 = por %p50, %p51
    %p53 = scmp.ne.s32.totalorder %s45, %s48
    %p54 = scmp.eq.s32.totalorder %s9, 0
    %p55 = por %p53, %p54
    %p56 = scmp.ne.s32.totalorder %s45, %s48
    %p57 = scmp.eq.s32.totalorder %s14, 1
    %p58 = por %p56, %p57
    %p59 = scmp.ne.s32.totalorder %s48, %s49
    %p60 = scmp.eq.s32.totalorder %s14, 0
    %p61 = por %p59, %p60
    %p62 = scmp.ne.s32.totalorder %s48, %s49
    %p63 = scmp.eq.s32.totalorder %s15, 1
    %p64 = por %p62, %p63
    %p66 = scmp.ne.s32.totalorder %s49, %s65
    %p67 = scmp.eq.s32.totalorder %s15, 0
    %p68 = por %p66, %p67
    %s69 = ssub.s32 %s9, %s16
    %p70 = scmp.eq.s32.totalorder %s69, 0
    %s72 = sadd.s32 %s71, 1
    %s73 = scalar_select %p70, %s71, %s72
    %p76 = pneg %p70
    %p77 = scmp.eq.s32.totalorder %s9, 1
    %p78 = por %p76, %p77
    %p79 = scmp.ne.s32.totalorder %s71, %s74
    %p80 = scmp.eq.s32.totalorder %s9, 0
    %p81 = por %p79, %p80
    %p82 = scmp.ne.s32.totalorder %s71, %s74
    %p83 = scmp.eq.s32.totalorder %s14, 1
    %p84 = por %p82, %p83
    %p85 = scmp.ne.s32.totalorder %s74, %s75
    %p86 = scmp.eq.s32.totalorder %s14, 0
    %p87 = por %p85, %p86
    %p88 = scmp.ne.s32.totalorder %s74, %s75
    %p89 = scmp.eq.s32.totalorder %s15, 1
    %p90 = por %p88, %p89
    %p92 = scmp.ne.s32.totalorder %s75, %s91
    %p93 = scmp.eq.s32.totalorder %s15, 0
    %p94 = por %p92, %p93
    %s95 = ssub.s32 %s9, %s16
    %p96 = scmp.eq.s32.totalorder %s95, 0
    %s98 = sadd.s32 %s97, 1
    %s99 = scalar_select %p96, %s97, %s98
    %p102 = pneg %p96
    %p103 = scmp.eq.s32.totalorder %s9, 1
    %p104 = por %p102, %p103
    %p105 = scmp.ne.s32.totalorder %s97, %s100
    %p106 = scmp.eq.s32.totalorder %s9, 0
    %p107 = por %p105, %p106
    %p108 = scmp.ne.s32.totalorder %s97, %s100
    %p109 = scmp.eq.s32.totalorder %s14, 1
    %p110 = por %p108, %p109
    %p111 = scmp.ne.s32.totalorder %s100, %s101
    %p112 = scmp.eq.s32.totalorder %s14, 0
    %p113 = por %p111, %p112
    %p114 = scmp.ne.s32.totalorder %s100, %s101
    %p115 = scmp.eq.s32.totalorder %s15, 1
    %p116 = por %p114, %p115
    %p118 = scmp.ne.s32.totalorder %s101, %s117
    %p119 = scmp.eq.s32.totalorder %s15, 0
    %p120 = por %p118, %p119
    %p121 = scmp.le.s32.totalorder 1, %s9
    %p122 = scmp.lt.s32.totalorder %s9, 3
    %p123 = pnand %p121, %p122
    %p124 = pneg %p123
    // Predicated region
    $region9: #{block_forward.6} parent=5 // pred_check
      _
    $region10: #{block_forward.6} parent=5 // pred_check_branch
      %126 = sbr.rel (%p123) target = $region12
    $region11: #{block_forward.6} parent=5 // pred_region
      %s127 = ssub.s32 %s9, 1
    $region12: #{block_forward.6} parent=5 // pred_fallthru
      _
    %p128 = scmp.lt.s32.totalorder %s9, 2
    // Predicated region
    $region13: #{block_forward.6} parent=5 // pred_check
      %p129 = pneg %p128
    $region14: #{block_forward.6} parent=5 // pred_check_branch
      %131 = sbr.rel (%p129) target = $region16
    $region15: #{block_forward.6} parent=5 // pred_region
      // Predicated region
      $region17: #{block_forward.6} parent=15 // pred_check
        %p132 = pneg %p29
      $region18: #{block_forward.6} parent=15 // pred_check_branch
        %134 = sbr.rel (%p132) target = $region20
      $region19: #{block_forward.6} parent=15 // pred_region
        %p135 = scmp.lt.s32.totalorder %s9, 1
        %s136 = scalar_select %p135, %s9, 1
        %s137 = smul.addr %s136, 4
        %s138 = smul.addr %s137, 4
        %s139 = scalar_lea.vmem %s0, %s138
      $region20: #{block_forward.6} parent=15 // pred_fallthru
        _
      // Predicated region
      $region21: #{block_forward.6} parent=15 // pred_check
        %p140 = pneg %p55
      $region22: #{block_forward.6} parent=15 // pred_check_branch
        %142 = sbr.rel (%p140) target = $region24
      $region23: #{block_forward.6} parent=15 // pred_region
        %p143 = scmp.lt.s32.totalorder %s9, 1
        %s144 = scalar_select %p143, %s9, 1
        %s145 = smul.addr %s144, 4
        %s146 = smul.addr %s145, 4
        %s147 = scalar_lea.vmem %s1, %s146
      $region24: #{block_forward.6} parent=15 // pred_fallthru
        _
      // Predicated region
      $region25: #{block_forward.6} parent=15 // pred_check
        %p148 = pneg %p81
      $region26: #{block_forward.6} parent=15 // pred_check_branch
        %150 = sbr.rel (%p148) target = $region28
      $region27: #{block_forward.6} parent=15 // pred_region
        %p151 = scmp.lt.s32.totalorder %s9, 1
        %s152 = scalar_select %p151, %s9, 1
        %s153 = smul.addr %s152, 4
        %s154 = smul.addr %s153, 4
        %s155 = scalar_lea.vmem %s2, %s154
      $region28: #{block_forward.6} parent=15 // pred_fallthru
        _
    $region16: #{block_forward.6} parent=5 // pred_fallthru
      _
    %p156 = scmp.le.s32.totalorder 1, %s9
    %p157 = scmp.lt.s32.totalorder %s9, 3
    %p158 = pnand %p156, %p157
    %p159 = pneg %p158
    // Predicated region
    $region29: #{block_forward.6} parent=5 // pred_check
      _
    $region30: #{block_forward.6} parent=5 // pred_check_branch
      %161 = sbr.rel (%p158) target = $region32
    $region31: #{block_forward.6} parent=5 // pred_region
      %s162 = ssub.s32 %s9, 1
      %p163 = scmp.lt.s32.totalorder %s14, 1
      %s164 = scalar_select %p163, %s14, 1
      %s165 = smul.addr %s164, 4
      %s166 = smul.addr %s165, 4
      %s167 = scalar_lea.vmem %s0, %s166
      %p168 = pneg %p35
      %p169 = pneg %p32
      %p170 = scmp.lt.s32.totalorder %s14, 1
      %s171 = scalar_select %p170, %s14, 1
      %s172 = smul.addr %s171, 4
      %s173 = smul.addr %s172, 4
      %s174 = scalar_lea.vmem %s1, %s173
      %p175 = pneg %p61
      %p176 = pneg %p58
      %p177 = scmp.lt.s32.totalorder %s14, 1
      %s178 = scalar_select %p177, %s14, 1
      %s179 = smul.addr %s178, 4
      %s180 = smul.addr %s179, 4
      %s181 = scalar_lea.vmem %s2, %s180
      %p182 = pneg %p87
      %p183 = pneg %p84
      %p184 = pneg %p113
      %p185 = pneg %p110
      %p186 = scmp.lt.s32.totalorder %s14, 1
      %s187 = scalar_select %p186, %s14, 1
      %s188 = smul.addr %s187, 4
      %s189 = scalar_lea.vmem %s3, %s188
      %p190 = scmp.lt.s32.totalorder %s14, 1
      %s191 = scalar_select %p190, %s14, 1
      %s192 = smul.addr %s191, 4
      %s193 = smul.addr %s192, 4
      %s194 = scalar_lea.vmem %s0, %s193
      %p195 = scmp.lt.s32.totalorder %s14, 1
      %s196 = scalar_select %p195, %s14, 1
      %s197 = smul.addr %s196, 4
      %s198 = smul.addr %s197, 4
      %s199 = scalar_lea.vmem %s1, %s198
      %p200 = scmp.lt.s32.totalorder %s14, 1
      %s201 = scalar_select %p200, %s14, 1
      %s202 = smul.addr %s201, 4
      %s203 = smul.addr %s202, 4
      %s204 = scalar_lea.vmem %s2, %s203
      %p205 = scmp.lt.s32.totalorder %s14, 1
      %s206 = scalar_select %p205, %s14, 1
      %s207 = smul.addr %s206, 4
      %s208 = scalar_lea.vmem %s3, %s207
      %v210 = vld [vmem:[%s194] sm:$0xf]
      %v211 = vld [vmem:[%s194 + $0x4] sm:$0xf]
      %v212 = vld [vmem:[%s194 + $0x8] sm:$0xf]
      %v213 = vld [vmem:[%s194 + $0xc] sm:$0xf]
      %v214 = vld [vmem:[%s199] sm:$0xf]
      %v215 = vld [vmem:[%s199 + $0x4] sm:$0xf]
      %v216 = vld [vmem:[%s199 + $0x8] sm:$0xf]
      %v217 = vld [vmem:[%s199 + $0xc] sm:$0xf]
      %v218 = vld [vmem:[%s204] sm:$0xf]
      %v219 = vld [vmem:[%s204 + $0x4] sm:$0xf]
      %v220 = vld [vmem:[%s204 + $0x8] sm:$0xf]
      %v221 = vld [vmem:[%s204 + $0xc] sm:$0xf]
      %vm222 = vcmask 64512
      %v224 = vsel %vm222, %v210, 0
      %v227 = vsel %vm222, %v214, 0
      %229 = vmatpush.bf16.xpose.msra.mxu0 0
      %230 = vmatpush.bf16.xpose.msra.mxu0 0
      %231 = vmatpush.bf16.xpose.msra.mxu0 0
      %232 = vmatpush.bf16.xpose.msra.mxu0 0
      %233 = vmatpush.bf16.xpose.msra.mxu0 0
      %234 = vmatpush.bf16.xpose.msra.mxu0 0
      %235 = vmatpush.bf16.xpose.msra.mxu0 0
      %236 = vmatpush.bf16.xpose.msra.mxu0 %v227
      %237 = vmatmul.bf16.gmra.mxu0 %v224
      %v238 = vpop.f32.mrf.mxu0
      %v239 = vadd.f32 0.0, %v238
      %v240 = vpop.f32.mrf.mxu0
      %241 = vdwg.mxu0
      %v243 = vsel %vm222, %v211, 0
      %v246 = vsel %vm222, %v215, 0
      %248 = vmatpush.bf16.xpose.msra.mxu0 0
      %249 = vmatpush.bf16.xpose.msra.mxu0 0
      %250 = vmatpush.bf16.xpose.msra.mxu0 0
      %251 = vmatpush.bf16.xpose.msra.mxu0 0
      %252 = vmatpush.bf16.xpose.msra.mxu0 0
      %253 = vmatpush.bf16.xpose.msra.mxu0 0
      %254 = vmatpush.bf16.xpose.msra.mxu0 0
      %255 = vmatpush.bf16.xpose.msra.mxu0 %v246
      %256 = vmatmul.bf16.gmra.mxu0 %v243
      %v257 = vpop.f32.mrf.mxu0
      %v258 = vadd.f32 0.0, %v257
      %v259 = vpop.f32.mrf.mxu0
      %260 = vdwg.mxu0
      %v262 = vsel %vm222, %v212, 0
      %v265 = vsel %vm222, %v216, 0
      %267 = vmatpush.bf16.xpose.msra.mxu0 0
      %268 = vmatpush.bf16.xpose.msra.mxu0 0
      %269 = vmatpush.bf16.xpose.msra.mxu0 0
      %270 = vmatpush.bf16.xpose.msra.mxu0 0
      %271 = vmatpush.bf16.xpose.msra.mxu0 0
      %272 = vmatpush.bf16.xpose.msra.mxu0 0
      %273 = vmatpush.bf16.xpose.msra.mxu0 0
      %274 = vmatpush.bf16.xpose.msra.mxu0 %v265
      %275 = vmatmul.bf16.gmra.mxu0 %v262
      %v276 = vpop.f32.mrf.mxu0
      %v277 = vadd.f32 0.0, %v276
      %v278 = vpop.f32.mrf.mxu0
      %279 = vdwg.mxu0
      %v281 = vsel %vm222, %v213, 0
      %v284 = vsel %vm222, %v217, 0
      %286 = vmatpush.bf16.xpose.msra.mxu0 0
      %287 = vmatpush.bf16.xpose.msra.mxu0 0
      %288 = vmatpush.bf16.xpose.msra.mxu0 0
      %289 = vmatpush.bf16.xpose.msra.mxu0 0
      %290 = vmatpush.bf16.xpose.msra.mxu0 0
      %291 = vmatpush.bf16.xpose.msra.mxu0 0
      %292 = vmatpush.bf16.xpose.msra.mxu0 0
      %293 = vmatpush.bf16.xpose.msra.mxu0 %v284
      %294 = vmatmul.bf16.gmra.mxu0 %v281
      %v295 = vpop.f32.mrf.mxu0
      %v296 = vadd.f32 0.0, %v295
      %v297 = vpop.f32.mrf.mxu0
      %298 = vdwg.mxu0
      %v299 = vmul.f32 %v239, 0.35355338
      %v300 = vmul.f32 %v258, 0.35355338
      %v301 = vmul.f32 %v277, 0.35355338
      %v302 = vmul.f32 %v296, 0.35355338
      %v303 = vsel %vm222, %v299, -inf
      %304 = vmax.xlane.f32.xlu0 %v303
      %v305 = vpop.xlane.xlu0 %304
      %v306 = vsel %vm222, %v300, -inf
      %307 = vmax.xlane.f32.xlu0 %v306
      %v308 = vpop.xlane.xlu0 %307
      %v309 = vsel %vm222, %v301, -inf
      %310 = vmax.xlane.f32.xlu0 %v309
      %v311 = vpop.xlane.xlu0 %310
      %v312 = vsel %vm222, %v302, -inf
      %313 = vmax.xlane.f32.xlu0 %v312
      %v314 = vpop.xlane.xlu0 %313
      %v315 = vsub.f32 %v299, %v305
      %v316 = vsub.f32 %v300, %v308
      %v317 = vsub.f32 %v301, %v311
      %v318 = vsub.f32 %v302, %v314
      %v319 = vmul.f32 %v315, 1.442695
      %v320 = vpow.pop %v319
      %v321 = vmul.f32 %v316, 1.442695
      %v322 = vpow.pop %v321
      %v323 = vmul.f32 %v317, 1.442695
      %v324 = vpow.pop %v323
      %v325 = vmul.f32 %v318, 1.442695
      %v326 = vpow.pop %v325
      %v327 = vsel %vm222, %v320, 0.0
      %328 = vadd.xlane.f32.xlu0 %v327
      %v329 = vpop.xlane.xlu0 %328
      %v330 = vsel %vm222, %v322, 0.0
      %331 = vadd.xlane.f32.xlu0 %v330
      %v332 = vpop.xlane.xlu0 %331
      %v333 = vsel %vm222, %v324, 0.0
      %334 = vadd.xlane.f32.xlu0 %v333
      %v335 = vpop.xlane.xlu0 %334
      %v336 = vsel %vm222, %v326, 0.0
      %337 = vadd.xlane.f32.xlu0 %v336
      %v338 = vpop.xlane.xlu0 %337
      %v339 = vrcp.pop %v329
      %v340 = vrcp.pop %v332
      %v341 = vrcp.pop %v335
      %v342 = vrcp.pop %v338
      %v343 = vmul.f32 %v320, %v339
      %v344 = vmul.f32 %v322, %v340
      %v345 = vmul.f32 %v324, %v341
      %v346 = vmul.f32 %v326, %v342
      %v347 = vpack.c.bf16 %v343, %v343
      %v348 = vpack.c.bf16 %v344, %v344
      %v349 = vpack.c.bf16 %v345, %v345
      %v350 = vpack.c.bf16 %v346, %v346
      %v352 = vsel %vm222, %v347, 0
      %vm354 = vcmask 1043456
      %v356 = vsel %vm354, %v218, 0
      %358 = vmatpush.bf16.msra.mxu0 0
      %359 = vmatpush.bf16.msra.mxu0 0
      %360 = vmatpush.bf16.msra.mxu0 0
      %361 = vmatpush.bf16.msra.mxu0 0
      %362 = vmatpush.bf16.msra.mxu0 0
      %363 = vmatpush.bf16.msra.mxu0 0
      %364 = vmatpush.bf16.msra.mxu0 0
      %365 = vmatpush.bf16.msra.mxu0 %v356
      %366 = vmatmul.bf16.gmra.mxu0 %v352
      %v367 = vpop.f32.mrf.mxu0
      %v368 = vadd.f32 0.0, %v367
      %v369 = vpop.f32.mrf.mxu0
      %370 = vdwg.mxu0
      %v372 = vsel %vm222, %v348, 0
      %v375 = vsel %vm354, %v219, 0
      %377 = vmatpush.bf16.msra.mxu0 0
      %378 = vmatpush.bf16.msra.mxu0 0
      %379 = vmatpush.bf16.msra.mxu0 0
      %380 = vmatpush.bf16.msra.mxu0 0
      %381 = vmatpush.bf16.msra.mxu0 0
      %382 = vmatpush.bf16.msra.mxu0 0
      %383 = vmatpush.bf16.msra.mxu0 0
      %384 = vmatpush.bf16.msra.mxu0 %v375
      %385 = vmatmul.bf16.gmra.mxu0 %v372
      %v386 = vpop.f32.mrf.mxu0
      %v387 = vadd.f32 0.0, %v386
      %v388 = vpop.f32.mrf.mxu0
      %389 = vdwg.mxu0
      %v391 = vsel %vm222, %v349, 0
      %v394 = vsel %vm354, %v220, 0
      %396 = vmatpush.bf16.msra.mxu0 0
      %397 = vmatpush.bf16.msra.mxu0 0
      %398 = vmatpush.bf16.msra.mxu0 0
      %399 = vmatpush.bf16.msra.mxu0 0
      %400 = vmatpush.bf16.msra.mxu0 0
      %401 = vmatpush.bf16.msra.mxu0 0
      %402 = vmatpush.bf16.msra.mxu0 0
      %403 = vmatpush.bf16.msra.mxu0 %v394
      %404 = vmatmul.bf16.gmra.mxu0 %v391
      %v405 = vpop.f32.mrf.mxu0
      %v406 = vadd.f32 0.0, %v405
      %v407 = vpop.f32.mrf.mxu0
      %408 = vdwg.mxu0
      %v410 = vsel %vm222, %v350, 0
      %v413 = vsel %vm354, %v221, 0
      %415 = vmatpush.bf16.msra.mxu0 0
      %416 = vmatpush.bf16.msra.mxu0 0
      %417 = vmatpush.bf16.msra.mxu0 0
      %418 = vmatpush.bf16.msra.mxu0 0
      %419 = vmatpush.bf16.msra.mxu0 0
      %420 = vmatpush.bf16.msra.mxu0 0
      %421 = vmatpush.bf16.msra.mxu0 0
      %422 = vmatpush.bf16.msra.mxu0 %v413
      %423 = vmatmul.bf16.gmra.mxu0 %v410
      %v424 = vpop.f32.mrf.mxu0
      %v425 = vadd.f32 0.0, %v424
      %v426 = vpop.f32.mrf.mxu0
      %427 = vdwg.mxu0
      %v428 = vpack.c.bf16 %v368, %v368
      %vm429 = vcmask 60416
      %430 = vst.msk [vmem:[%s208] sm:$0xf] %vm429, %v428
      %v431 = vpack.c.bf16 %v387, %v387
      %433 = vrot.lane.b32.xlu0 %v431, 8
      %v434 = vpop.permute.xlu0 %433
      %vm436 = vcmask 126016
      %437 = vst.msk [vmem:[%s208] sm:$0xf] %vm436, %v434
      %v438 = vpack.c.bf16 %v406, %v406
      %440 = vrot.lane.b32.xlu0 %v438, 16
      %v441 = vpop.permute.xlu0 %440
      %vm443 = vcmask 191616
      %444 = vst.msk [vmem:[%s208] sm:$0xf] %vm443, %v441
      %v445 = vpack.c.bf16 %v425, %v425
      %447 = vrot.lane.b32.xlu0 %v445, 24
      %v448 = vpop.permute.xlu0 %447
      %vm450 = vcmask 257216
      %451 = vst.msk [vmem:[%s208] sm:$0xf] %vm450, %v448
      %p452 = scmp.lt.s32.totalorder %s14, 1
      %s453 = scalar_select %p452, %s14, 1
      %s454 = smul.addr %s453, 4
      %s455 = scalar_lea.vmem %s3, %s454
      // Predicated region
      $region33: #{block_forward.6} parent=31 // pred_check
        %p456 = pneg %p110
      $region34: #{block_forward.6} parent=31 // pred_check_branch
        %458 = sbr.rel (%p456) target = $region36
      $region35: #{block_forward.6} parent=31 // pred_region
        _
      $region36: #{block_forward.6} parent=31 // pred_fallthru
        _
    $region32: #{block_forward.6} parent=5 // pred_fallthru
      _
    %p459 = scmp.le.s32.totalorder 2, %s9
    // Predicated region
    $region37: #{block_forward.6} parent=5 // pred_check
      %p460 = pneg %p459
    $region38: #{block_forward.6} parent=5 // pred_check_branch
      %462 = sbr.rel (%p460) target = $region40
    $region39: #{block_forward.6} parent=5 // pred_region
      %s463 = ssub.s32 %s9, 2
      // Predicated region
      $region41: #{block_forward.6} parent=39 // pred_check
        %p464 = pneg %p116
      $region42: #{block_forward.6} parent=39 // pred_check_branch
        %466 = sbr.rel (%p464) target = $region44
      $region43: #{block_forward.6} parent=39 // pred_region
        %p467 = scmp.lt.s32.totalorder %s15, 1
        %s468 = scalar_select %p467, %s15, 1
        %s469 = smul.addr %s468, 4
        %s470 = scalar_lea.vmem %s3, %s469
      $region44: #{block_forward.6} parent=39 // pred_fallthru
        _
    $region40: #{block_forward.6} parent=5 // pred_fallthru
      _
  $region6: #{block_forward.6} parent=0 // loop_footer
    %s13 = sadd.s32 1, %s9
  $region7: #{block_forward.6} parent=0 // loop_footer_branch
    %8 = sbr.rel target = $region3
  $region8: #{block_forward.6} parent=0 // loop_exit
    _

// kernel: block_forward.8
$region0: #{block_forward.8}
  #allocation0 [shape = 'u32[]', space=smem, size = 0x4, offset = 0x4, fixed_abs, tag = 'smem constant byte address 0x4 - core index']
  #allocation1 [shape = 'u32[72,128]{1,0:T(1,128)}', space=vmem, size = 0x9000, scoped, tag = 'internal scratch']
  %s0 = inlined_call_operand.vmem [shape: f32[16,32], index: 0, kind: input, shape index: {}]
  %s1 = inlined_call_operand.vmem [shape: f32[1,32], index: 1, kind: input, shape index: {}]
  %s2 = inlined_call_operand.vmem [shape: f32[1,32], index: 2, kind: input, shape index: {}]
  %s3 = inlined_call_operand.vmem [shape: bf16[32,128], index: 3, kind: input, shape index: {}]
  %s4 = inlined_call_operand.vmem [shape: f32[1,128], index: 4, kind: input, shape index: {}]
  %s5 = inlined_call_operand.vmem [shape: bf16[16,128], index: 5, kind: output, shape index: {}]
  %s6 = sld [smem:[#allocation0]]
  $region30: #{block_forward.8} parent=0
    _
  %s8 = ssub.s32 1, %s6
  %s9 = scalar_select 0, %s8, %s6
  // Predicated region
  $region2: #{block_forward.8} parent=0 // pred_check
    _
  $region3: #{block_forward.8} parent=0 // pred_check_branch
    %11 = sbr.rel (0) target = $region5
  $region4: #{block_forward.8} parent=0 // pred_region
    _
  $region5: #{block_forward.8} parent=0 // pred_fallthru
    _
  // Predicated region
  $region6: #{block_forward.8} parent=0 // pred_check
    _
  $region7: #{block_forward.8} parent=0 // pred_check_branch
    %13 = sbr.rel (0) target = $region9
  $region8: #{block_forward.8} parent=0 // pred_region
    _
  $region9: #{block_forward.8} parent=0 // pred_fallthru
    _
  // Predicated region
  $region10: #{block_forward.8} parent=0 // pred_check
    _
  $region11: #{block_forward.8} parent=0 // pred_check_branch
    %15 = sbr.rel (0) target = $region13
  $region12: #{block_forward.8} parent=0 // pred_region
    _
  $region13: #{block_forward.8} parent=0 // pred_fallthru
    _
  // Predicated region
  $region14: #{block_forward.8} parent=0 // pred_check
    _
  $region15: #{block_forward.8} parent=0 // pred_check_branch
    %17 = sbr.rel (0) target = $region17
  $region16: #{block_forward.8} parent=0 // pred_region
    _
  $region17: #{block_forward.8} parent=0 // pred_fallthru
    _
  // Predicated region
  $region18: #{block_forward.8} parent=0 // pred_check
    _
  $region19: #{block_forward.8} parent=0 // pred_check_branch
    %19 = sbr.rel (0) target = $region21
  $region20: #{block_forward.8} parent=0 // pred_region
    _
  $region21: #{block_forward.8} parent=0 // pred_fallthru
    _
  %v21 = vld [vmem:[%s0] sm:$0xff]
  %v22 = vld [vmem:[%s0 + $0x8] sm:$0xff]
  %vm23 = vcmask 261120
  %v24 = vsel %vm23, %v21, 0.0
  %25 = vadd.xlane.f32.xlu0 %v24
  %v26 = vpop.xlane.xlu0 %25
  %v27 = vsel %vm23, %v22, 0.0
  %28 = vadd.xlane.f32.xlu0 %v27
  %v29 = vpop.xlane.xlu0 %28
  %v30 = vrcp.pop 32.0
  %v31 = vmul.f32 32.0, %v30
  %v32 = vsub.f32 1.0, %v31
  %v33 = vmul.f32 %v30, %v32
  %v34 = vadd.f32 %v30, %v33
  %vm35 = vweird.f32 %v30
  %v36 = vsel %vm35, %v30, %v34
  %v37 = vmul.f32 %v26, %v36
  %v38 = vmul.f32 %v29, %v36
  %v39 = vsub.f32 %v21, %v37
  %v40 = vsub.f32 %v22, %v38
  %v41 = vmul.f32 %v39, %v39
  %v42 = vmul.f32 %v40, %v40
  %v43 = vsel %vm23, %v41, 0.0
  %44 = vadd.xlane.f32.xlu0 %v43
  %v45 = vpop.xlane.xlu0 %44
  %v46 = vsel %vm23, %v42, 0.0
  %47 = vadd.xlane.f32.xlu0 %v46
  %v48 = vpop.xlane.xlu0 %47
  %v49 = vmul.f32 %v45, %v36
  %v50 = vmul.f32 %v48, %v36
  %v51 = vadd.f32 %v49, 1e-06
  %v52 = vadd.f32 %v50, 1e-06
  %v53 = vrsqrt.pop %v51
  %v54 = vmul.f32 %v53, %v51
  %v55 = vmul.f32 %v54, %v53
  %v56 = vmul.f32 0.5, %v55
  %v57 = vsub.f32 1.5, %v56
  %v58 = vmul.f32 %v53, %v57
  %vm59 = vweird.f32 %v51
  %vm60 = vweird.f32 %v53
  %vm61 = vmor %vm59, %vm60
  %v62 = vsel %vm61, %v53, %v58
  %v63 = vrsqrt.pop %v52
  %v64 = vmul.f32 %v63, %v52
  %v65 = vmul.f32 %v64, %v63
  %v66 = vmul.f32 0.5, %v65
  %v67 = vsub.f32 1.5, %v66
  %v68 = vmul.f32 %v63, %v67
  %vm69 = vweird.f32 %v52
  %vm70 = vweird.f32 %v63
  %vm71 = vmor %vm69, %vm70
  %v72 = vsel %vm71, %v63, %v68
  %v73 = vmul.f32 %v39, %v62
  %v74 = vmul.f32 %v40, %v72
  %v75 = vld [vmem:[%s1] sm:$0x1]
  %v77 = vperm.slane %v75, 0
  %v79 = vmul.f32 %v73, %v77
  %v80 = vmul.f32 %v74, %v77
  %v81 = vld [vmem:[%s2] sm:$0x1]
  %v83 = vperm.slane %v81, 0
  %v85 = vadd.f32 %v79, %v83
  %v86 = vadd.f32 %v80, %v83
  %v87 = vpack.c.bf16 %v86, %v85
  %v88 = vld [vmem:[%s3] sm:$0xf]
  %v89 = vld [vmem:[%s3 + $0x4] sm:$0xf]
  %v90 = vld [vmem:[%s3 + $0x8] sm:$0xf]
  %v91 = vld [vmem:[%s3 + $0xc] sm:$0xf]
  %v92 = vld [vmem:[%s4] sm:$0x1]
  %v94 = vperm.slane %v92, 0
  %v100 = vunpack.c.l.b16 %v88
  %v101 = vunpack.c.l.b16 %v89
  %v102 = vunpack.c.l.b16 %v90
  %v103 = vunpack.c.l.b16 %v91
  %v104 = vpack.c.b16 %v101, %v100
  %v105 = vpack.c.b16 %v103, %v102
  %v109 = vsel %vm23, %v87, 0
  %111 = vmatpush.bf16.msra.mxu0 0
  %112 = vmatpush.bf16.msra.mxu0 0
  %113 = vmatpush.bf16.msra.mxu0 0
  %114 = vmatpush.bf16.msra.mxu0 0
  %115 = vmatpush.bf16.msra.mxu0 0
  %116 = vmatpush.bf16.msra.mxu0 0
  %117 = vmatpush.bf16.msra.mxu0 %v105
  %118 = vmatpush.bf16.msra.mxu0 %v104
  %119 = vmatmul.bf16.gmra.mxu0 %v109
  %v120 = vpop.f32.mrf.mxu0
  %v121 = vadd.f32 %v94, %v120
  %v122 = vpop.f32.mrf.mxu0
  %v123 = vadd.f32 %v94, %v122
  %124 = vdwg.mxu0
  %v125 = vmul.f32 %v121, 0.5
  %v126 = vmul.f32 %v123, 0.5
  %v127 = vmul.f32 %v121, 0.70710677
  %v128 = vmul.f32 %v123, 0.70710677
  %vm129 = vcmp.ge.f32.partialorder %v127, 0.0
  %vm130 = vcmp.ge.f32.partialorder %v128, 0.0
  %v131 = vsel %vm129, 1.0, -1.0
  %v132 = vsel %vm130, 1.0, -1.0
  %v133 = vand.u32 2147483647, %v127
  %v134 = vand.u32 2147483647, %v128
  %v135 = vmul.f32 %v133, 0.3275911
  %v136 = vmul.f32 %v134, 0.3275911
  %v137 = vadd.f32 %v135, 1.0
  %v138 = vadd.f32 %v136, 1.0
  %v139 = vrcp.pop %v137
  %v140 = vrcp.pop %v138
  %v141 = vmul.f32 %v139, 1.0614054
  %v142 = vmul.f32 %v140, 1.0614054
  %v143 = vadd.f32 %v141, -1.4531521
  %v144 = vadd.f32 %v142, -1.4531521
  %v145 = vmul.f32 %v143, %v139
  %v146 = vmul.f32 %v144, %v140
  %v147 = vadd.f32 %v145, 1.4214138
  %v148 = vadd.f32 %v146, 1.4214138
  %v149 = vmul.f32 %v147, %v139
  %v150 = vmul.f32 %v148, %v140
  %v151 = vadd.f32 %v149, -0.28449672
  %v152 = vadd.f32 %v150, -0.28449672
  %v153 = vmul.f32 %v151, %v139
  %v154 = vmul.f32 %v152, %v140
  %v155 = vadd.f32 %v153, 0.2548296
  %v156 = vadd.f32 %v154, 0.2548296
  %v157 = vmul.f32 %v155, %v139
  %v158 = vmul.f32 %v156, %v140
  %v159 = vsub.f32 0.0, %v133
  %v160 = vsub.f32 0.0, %v134
  %v161 = vmul.f32 %v159, %v133
  %v162 = vmul.f32 %v160, %v134
  %v163 = vmul.f32 %v161, 1.442695
  %v164 = vpow.pop %v163
  %v165 = vmul.f32 %v162, 1.442695
  %v166 = vpow.pop %v165
  %v167 = vmul.f32 %v157, %v164
  %v168 = vmul.f32 %v158, %v166
  %v169 = vsub.f32 1.0, %v167
  %v170 = vsub.f32 1.0, %v168
  %v171 = vmul.f32 %v131, %v169
  %v172 = vmul.f32 %v132, %v170
  %v173 = vadd.f32 %v171, 1.0
  %v174 = vadd.f32 %v172, 1.0
  %v175 = vmul.f32 %v125, %v173
  %v176 = vmul.f32 %v126, %v174
  %v177 = vpack.c.bf16 %v175, %v175
  %v178 = vpack.c.bf16 %v176, %v176
  %179 = vst [vmem:[%s5] sm:$0xf] %v177
  %180 = vst [vmem:[%s5 + $0x4] sm:$0xf] %v178
  // Predicated region
  $region22: #{block_forward.8} parent=0 // pred_check
    _
  $region23: #{block_forward.8} parent=0 // pred_check_branch
    %182 = sbr.rel (0) target = $region25
  $region24: #{block_forward.8} parent=0 // pred_region
    _
  $region25: #{block_forward.8} parent=0 // pred_fallthru
    _
  // Predicated region
  $region26: #{block_forward.8} parent=0 // pred_check
    _
  $region27: #{block_forward.8} parent=0 // pred_check_branch
    %184 = sbr.rel (0) target = $region29
  $region28: #{block_forward.8} parent=0 // pred_region
    _
  $region29: #{block_forward.8} parent=0 // pred_fallthru
    _

// kernel: block_forward.9
$region0: #{block_forward.9}
  #allocation0 [shape = 'u32[]', space=smem, size = 0x4, offset = 0x4, fixed_abs, tag = 'smem constant byte address 0x4 - core index']
  #allocation1 [shape = 'u32[72,128]{1,0:T(1,128)}', space=vmem, size = 0x9000, scoped, tag = 'internal scratch']
  %s0 = inlined_call_operand.vmem [shape: bf16[16,128], index: 0, kind: input, shape index: {}]
  %s1 = inlined_call_operand.vmem [shape: bf16[128,32], index: 1, kind: input, shape index: {}]
  %s2 = inlined_call_operand.vmem [shape: f32[1,32], index: 2, kind: input, shape index: {}]
  %s3 = inlined_call_operand.vmem [shape: f32[16,32], index: 3, kind: input, shape index: {}]
  %s4 = inlined_call_operand.hbm [shape: f32[16,32], index: 4, kind: output, shape index: {}]
  %s5 = sld [smem:[#allocation0]]
  $region26: #{block_forward.9} parent=0
    _
  %s7 = ssub.s32 1, %s5
  %s8 = scalar_select 0, %s7, %s5
  $region1: #{block_forward.9} parent=0
    #allocation2 [shape = 'u8[8192]{0}', space=vmem, size = 0x2000, scoped, tag = 'output window, operand 0, single buffered']
    #allocation3 [shape = 's32[1]{0}', space=sflag, size = 0x4, scoped, tag = 'scoped memory for block_forward.9']
    %9 = vsyncpa [#allocation3], 0
    // Predicated region
    $region2: #{block_forward.9} parent=1 // pred_check
      _
    $region3: #{block_forward.9} parent=1 // pred_check_branch
      %11 = sbr.rel (0) target = $region5
    $region4: #{block_forward.9} parent=1 // pred_region
      _
    $region5: #{block_forward.9} parent=1 // pred_fallthru
      _
    // Predicated region
    $region6: #{block_forward.9} parent=1 // pred_check
      _
    $region7: #{block_forward.9} parent=1 // pred_check_branch
      %13 = sbr.rel (0) target = $region9
    $region8: #{block_forward.9} parent=1 // pred_region
      _
    $region9: #{block_forward.9} parent=1 // pred_fallthru
      _
    // Predicated region
    $region10: #{block_forward.9} parent=1 // pred_check
      _
    $region11: #{block_forward.9} parent=1 // pred_check_branch
      %15 = sbr.rel (0) target = $region13
    $region12: #{block_forward.9} parent=1 // pred_region
      _
    $region13: #{block_forward.9} parent=1 // pred_fallthru
      _
    // Predicated region
    $region14: #{block_forward.9} parent=1 // pred_check
      _
    $region15: #{block_forward.9} parent=1 // pred_check_branch
      %17 = sbr.rel (0) target = $region17
    $region16: #{block_forward.9} parent=1 // pred_region
      _
    $region17: #{block_forward.9} parent=1 // pred_fallthru
      _
    %v18 = vld [vmem:[%s0] sm:$0xf]
    %v19 = vld [vmem:[%s0 + $0x4] sm:$0xf]
    %v20 = vld [vmem:[%s1] sm:$0xf]
    %v21 = vld [vmem:[%s1 + $0x4] sm:$0xf]
    %v22 = vld [vmem:[%s1 + $0x8] sm:$0xf]
    %v23 = vld [vmem:[%s1 + $0xc] sm:$0xf]
    %v24 = vld [vmem:[%s1 + $0x10] sm:$0xf]
    %v25 = vld [vmem:[%s1 + $0x14] sm:$0xf]
    %v26 = vld [vmem:[%s1 + $0x18] sm:$0xf]
    %v27 = vld [vmem:[%s1 + $0x1c] sm:$0xf]
    %v28 = vld [vmem:[%s1 + $0x20] sm:$0xf]
    %v29 = vld [vmem:[%s1 + $0x24] sm:$0xf]
    %v30 = vld [vmem:[%s1 + $0x28] sm:$0xf]
    %v31 = vld [vmem:[%s1 + $0x2c] sm:$0xf]
    %v32 = vld [vmem:[%s1 + $0x30] sm:$0xf]
    %v33 = vld [vmem:[%s1 + $0x34] sm:$0xf]
    %v34 = vld [vmem:[%s1 + $0x38] sm:$0xf]
    %v35 = vld [vmem:[%s1 + $0x3c] sm:$0xf]
    %v36 = vld [vmem:[%s2] sm:$0x1]
    %v38 = vperm.slane %v36, 0
    %v42 = vunpack.c.l.b16 %v18
    %v43 = vunpack.c.l.b16 %v19
    %v44 = vpack.c.b16 %v43, %v42
    %v62 = vunpack.c.l.b16 %v20
    %v63 = vunpack.c.l.b16 %v21
    %v64 = vunpack.c.l.b16 %v22
    %v65 = vunpack.c.l.b16 %v23
    %v66 = vunpack.c.l.b16 %v24
    %v67 = vunpack.c.l.b16 %v25
    %v68 = vunpack.c.l.b16 %v26
    %v69 = vunpack.c.l.b16 %v27
    %v70 = vunpack.c.l.b16 %v28
    %v71 = vunpack.c.l.b16 %v29
    %v72 = vunpack.c.l.b16 %v30
    %v73 = vunpack.c.l.b16 %v31
    %v74 = vunpack.c.l.b16 %v32
    %v75 = vunpack.c.l.b16 %v33
    %v76 = vunpack.c.l.b16 %v34
    %v77 = vunpack.c.l.b16 %v35
    %v78 = vpack.c.b16 %v63, %v62
    %v79 = vpack.c.b16 %v65, %v64
    %v80 = vpack.c.b16 %v67, %v66
    %v81 = vpack.c.b16 %v69, %v68
    %v82 = vpack.c.b16 %v71, %v70
    %v83 = vpack.c.b16 %v73, %v72
    %v84 = vpack.c.b16 %v75, %v74
    %v85 = vpack.c.b16 %v77, %v76
    %94 = vmatpush.bf16.msra.mxu0 %v85
    %95 = vmatpush.bf16.msra.mxu0 %v84
    %96 = vmatpush.bf16.msra.mxu0 %v83
    %97 = vmatpush.bf16.msra.mxu0 %v82
    %98 = vmatpush.bf16.msra.mxu0 %v81
    %99 = vmatpush.bf16.msra.mxu0 %v80
    %100 = vmatpush.bf16.msra.mxu0 %v79
    %101 = vmatpush.bf16.msra.mxu0 %v78
    %102 = vmatmul.bf16.gmra.mxu0 %v44
    %v103 = vpop.f32.mrf.mxu0
    %v104 = vadd.f32 %v38, %v103
    %v105 = vpop.f32.mrf.mxu0
    %v106 = vadd.f32 %v38, %v105
    %107 = vdwg.mxu0
    %v108 = vld [vmem:[%s3] sm:$0xff]
    %v109 = vld [vmem:[%s3 + $0x8] sm:$0xff]
    %v110 = vadd.f32 %v104, %v108
    %v111 = vadd.f32 %v106, %v109
    %vm112 = vcmask 261120
    %113 = vst.msk [vmem:[#allocation2] sm:$0xff] %vm112, %v110
    %114 = vst.msk [vmem:[#allocation2 + $0x8] sm:$0xff] %vm112, %v111
    // Predicated region
    $region18: #{block_forward.9} parent=1 // pred_check
      _
    $region19: #{block_forward.9} parent=1 // pred_check_branch
      %116 = sbr.rel (0) target = $region21
    $region20: #{block_forward.9} parent=1 // pred_region
      %118 = vsyncadd [#allocation3], 0
      %s119 = sshll.u32 [#allocation2], 4
      %s120 = int_to_ptr.vmem [resolvable:$true] %s119
      %s121 = sshll.u32 %s4, 4
      %s122 = int_to_ptr.hbm [resolvable:$true] %s121
      %127 = dma.vmem_to_hbm [thread:$0]  %s120, 256, %s122, [#allocation3], 128, 128, 8
    $region21: #{block_forward.9} parent=1 // pred_fallthru
      _
    // Predicated region
    $region22: #{block_forward.9} parent=1 // pred_check
      _
    $region23: #{block_forward.9} parent=1 // pred_check_branch
      %129 = sbr.rel (0) target = $region25
    $region24: #{block_forward.9} parent=1 // pred_region
      %131 = dma.done [#allocation3], 256
    $region25: #{block_forward.9} parent=1 // pred_fallthru
      _
    %132 = vsyncpa [#allocation3], 1

</llo_original>
